<compile_context>
chip_gen: v7x
topology: tpu7x:2x2x1
jax: 0.10.0
libtpu: 0.0.40
codegen_flags: <defaults>
</compile_context>

<pallas_src>
import math
import numpy as np
import jax
import jax.numpy as jnp
from jax.experimental import pallas as pl
from jax.experimental.pallas import tpu as pltpu


def _round_up(x, m):
    return ((x + m - 1) // m) * m


def _tpu_gen():
    """Best-effort chip-generation detection for per-generation defaults."""
    try:
        kind = jax.devices()[0].device_kind.lower()
    except Exception:
        return 0
    for g in (2, 3, 4, 5):
        if f"v{g}" in kind:
            return g
    return 6  # v6e / v7x / newer


def thnn_kernel(h_ref, rp_ref, iz_ref, inv_deg_ref,
                prod_ref, zc_ref, e2_ref, wq_ref, bq_ref,
                out_ref, s_acc, e2_acc):
    """Grid = (node tiles ["parallel"], edge chunks ["arbitrary", last])."""
    k = pl.program_id(1)

    @pl.when(k == 0)
    def _init():
        s_acc[...] = jnp.zeros_like(s_acc)
        e2_acc[...] = jnp.zeros_like(e2_acc)

    h = h_ref[...]            # [T, Ec]  incidence rows (0/1)
    rp = rp_ref[...]          # [T, R]   1 / P   (zeros -> 1)
    iz = iz_ref[...]          # [T, R]   (P == 0)
    prod = prod_ref[...]      # [R, Ec]  coef_e * prod_{j in e, P!=0} P[j]   (transposed)
    zc = zc_ref[...]          # [R, Ec]  # of zero members per edge          (transposed)

    # Zero-safe divide-out exclusion product, edge axis on lanes:
    #   excl[i, r, e] = coef_e * prod_{j in e, j != i} P[j, r]
    excl = prod[jnp.newaxis, :, :] * rp[:, :, jnp.newaxis]        # [T, R, Ec]
    other_zeros = zc[jnp.newaxis, :, :] - iz[:, :, jnp.newaxis]   # zeros among j != i
    excl = jnp.where(other_zeros > 0.5, 0.0, excl)
    t = jnp.tanh(excl)                                            # [T, R, Ec]
    t = jnp.where(h[:, jnp.newaxis, :] > 0, t, 0.0)               # keep incident edges only

    # lane-axis (edge) reduction -> XLU; accumulate in f32
    s_acc[...] += jnp.sum(t, axis=2, dtype=jnp.float32)           # [T, R]
    # per-edge P2 sums (already relu'd per edge): one bf16 MXU matmul per chunk
    e2_acc[...] += jnp.dot(h.astype(jnp.bfloat16), e2_ref[...],
                           preferred_element_type=jnp.float32)    # [T, O]

    @pl.when(k == pl.num_programs(1) - 1)
    def _finish():
        q = jnp.dot(s_acc[...].astype(jnp.bfloat16),
                    wq_ref[...].astype(jnp.bfloat16),
                    preferred_element_type=jnp.float32)           # [T, O]
        out = (q + e2_acc[...]) * inv_deg_ref[...] + bq_ref[...]  # mean over edges + bias
        out_ref[...] = jnp.maximum(out, 0.0)


def thnn_forward(embedding, H, params, tile_n=None, tile_e=None):
    """embedding: jnp [N, featdim]; H: np.ndarray [N_nodes, N_edges] of 0/1."""
    wp, bp, w1, b1, w2, b2, wq, bq = params
    n_nodes = embedding.shape[0]
    n_edges = H.shape[1]
    rank = wp.shape[1]
    outdim = wq.shape[1]

    gen = _tpu_gen()
    use_bf16_ew = gen >= 6                      # bf16 VPU/EUP only on v6e / v7x
    if tile_n is None:
        tile_n = 256 if gen >= 6 else 128       # fill the MXU M dimension
    if tile_e is None:
        tile_e = 256                            # bounds the [T, R, Ec] intermediate
    tile_n = min(tile_n, _round_up(max(n_nodes, 1), 8))
    tile_e = min(tile_e, _round_up(max(n_edges, 1), 128))
    ew_dtype = jnp.bfloat16 if use_bf16_ew else jnp.float32

    Hj = jnp.asarray(np.asarray(H), jnp.float32)                       # [N, E]
    x1 = jnp.concatenate(
        [embedding, jnp.ones((n_nodes, 1), embedding.dtype)], axis=1)  # [N, F+1]

    # ---- shared MLPs once, in plain XLA (default precision) ----
    P = jnp.dot(x1, wp) + bp                                           # [N, R]
    hid = jnp.maximum(jnp.dot(x1, w1) + b1, 0.0)
    P2 = jnp.dot(hid, w2) + b2                                         # [N, O]
    E2 = jnp.maximum(jnp.dot(Hj.T, P2), 0.0)                           # [E, O]

    # ---- node-independent per-edge products of P, in log space (no [N,E,R]) ----
    is_zero = (P == 0.0).astype(jnp.float32)                           # [N, R]
    Pnz = jnp.where(P == 0.0, 1.0, P)
    recip_P = 1.0 / Pnz                                                # [N, R]
    neg = (P < 0.0).astype(jnp.float32)
    sum_log = jnp.dot(Hj.T, jnp.log(jnp.abs(Pnz)))                     # [E, R]
    neg_cnt = jnp.dot(Hj.T, neg)                                       # [E, R]
    zero_cnt = jnp.dot(Hj.T, is_zero)                                  # [E, R]
    sign = 1.0 - 2.0 * jnp.mod(neg_cnt, 2.0)

    edge_sizes = np.asarray(H).sum(axis=0)
    log_coef = -np.array([math.lgamma(max(int(m), 1)) for m in edge_sizes],
                         dtype=np.float32)[:, None]                    # log 1/(|e|-1)!
    prod_scaled = sign * jnp.exp(sum_log + jnp.asarray(log_coef))      # [E, R]

    deg = jnp.sum(Hj, axis=1, keepdims=True)                           # [N, 1]
    inv_deg = jnp.where(deg > 0, 1.0 / jnp.maximum(deg, 1.0), 0.0)

    # ---- pad nodes/edges to tile multiples ----
    n_pad = _round_up(n_nodes, tile_n)
    e_pad = _round_up(n_edges, tile_e)
    Hp = jnp.pad(Hj, ((0, n_pad - n_nodes), (0, e_pad - n_edges)))
    rp_p = jnp.pad(recip_P, ((0, n_pad - n_nodes), (0, 0)), constant_values=1.0)
    iz_p = jnp.pad(is_zero, ((0, n_pad - n_nodes), (0, 0)))
    invdeg_p = jnp.pad(inv_deg, ((0, n_pad - n_nodes), (0, 0)))
    prodT = jnp.pad(prod_scaled.T, ((0, 0), (0, e_pad - n_edges)))     # [R, Ep]
    zcT = jnp.pad(zero_cnt.T, ((0, 0), (0, e_pad - n_edges)))          # [R, Ep]
    E2p = jnp.pad(E2, ((0, e_pad - n_edges), (0, 0)))                  # [Ep, O]

    # kernel dtypes
    Hp = Hp.astype(ew_dtype)
    rp_p = rp_p.astype(ew_dtype)
    iz_p = iz_p.astype(ew_dtype)
    prodT = prodT.astype(ew_dtype)
    zcT = zcT.astype(ew_dtype)
    E2p = E2p.astype(jnp.bfloat16)          # MXU operand (halves DMA traffic too)
    invdeg_p = invdeg_p.astype(jnp.float32)
    wq32 = jnp.asarray(wq, jnp.float32)
    bq32 = jnp.asarray(bq, jnp.float32)

    grid = (n_pad // tile_n, e_pad // tile_e)
    grid_spec = pltpu.PrefetchScalarGridSpec(
        num_scalar_prefetch=0,
        grid=grid,
        in_specs=[
            pl.BlockSpec((tile_n, tile_e), lambda i, k: (i, k)),    # H rows
            pl.BlockSpec((tile_n, rank), lambda i, k: (i, 0)),      # 1/P
            pl.BlockSpec((tile_n, rank), lambda i, k: (i, 0)),      # (P == 0)
            pl.BlockSpec((tile_n, 1), lambda i, k: (i, 0)),         # 1/degree
            pl.BlockSpec((rank, tile_e), lambda i, k: (0, k)),      # prod^T chunk
            pl.BlockSpec((rank, tile_e), lambda i, k: (0, k)),      # zero_cnt^T chunk
            pl.BlockSpec((tile_e, outdim), lambda i, k: (k, 0)),    # E2 chunk
            pl.BlockSpec((rank, outdim), lambda i, k: (0, 0)),      # wq
            pl.BlockSpec((1, outdim), lambda i, k: (0, 0)),         # bq
        ],
        out_specs=pl.BlockSpec((tile_n, outdim), lambda i, k: (i, 0)),
        scratch_shapes=[
            pltpu.VMEM((tile_n, rank), jnp.float32),    # s accumulator
            pltpu.VMEM((tile_n, outdim), jnp.float32),  # e2 accumulator
        ],
    )
    out = pl.pallas_call(
        thnn_kernel,
        out_shape=jax.ShapeDtypeStruct((n_pad, outdim), jnp.float32),
        grid_spec=grid_spec,
        compiler_params=pltpu.CompilerParams(
            dimension_semantics=("parallel", "arbitrary"),
            vmem_limit_bytes=48 * 1024 * 1024,
        ),
    )(Hp, rp_p, iz_p, invdeg_p, prodT, zcT, E2p, wq32, bq32)
    return out[:n_nodes]


def ref_forward_numpy(embedding, H, params):
    """Literal (loopy) numpy transcription of the PyTorch forward, for checking."""
    wp, bp, w1, b1, w2, b2, wq, bq = [np.asarray(a, dtype=np.float64) for a in params]
    emb = np.asarray(embedding, dtype=np.float64)
    Hn = np.asarray(H)
    n = emb.shape[0]
    x1 = np.concatenate([emb, np.ones((n, 1))], axis=1)
    P = x1 @ wp + bp
    hid = np.maximum(x1 @ w1 + b1, 0.0)
    P2 = hid @ w2 + b2
    rank = P.shape[1]
    rows = []
    for node in range(n):
        edges = np.argwhere(Hn[node] == 1).reshape(-1)
        s1, s2 = [], []
        for e in edges:
            members = np.argwhere(Hn[:, e] == 1).reshape(-1)
            ee = np.ones(rank)
            ee2 = np.zeros(P2.shape[1])
            for j in members:
                if int(node) != int(j):
                    ee = ee * P[int(j)]
                ee2 = ee2 + P2[int(j)]
            s1.append(np.tanh(ee / math.factorial(len(members) - 1)))
            s2.append(ee2)
        s1 = np.stack(s1)
        s2 = np.stack(s2)
        node_out = ((s1 @ wq + bq) + np.maximum(s2, 0.0)).mean(axis=0)
        rows.append(node_out)
    return np.maximum(np.stack(rows), 0.0)


if __name__ == "__main__":
    N_NODES, N_EDGES = 16, 16
    FEATDIM, HIDDEN, OUTDIM, RANK = 15, 32, 32, 16
    F1 = FEATDIM + 1

    # deterministic small hypergraph: edge e contains nodes {e, e+1, e+3} (mod N)
    H = np.zeros((N_NODES, N_EDGES), dtype=np.float32)
    for e in range(N_EDGES):
        for v in (e, (e + 1) % N_NODES, (e + 3) % N_NODES):
            H[v, e] = 1.0

    key = jax.random.PRNGKey(0)
    ks = jax.random.split(key, 8)
    # p_network init per module: normal(0, sqrt(1/(featdim+1))), bias 0
    wp = jax.random.normal(ks[0], (F1, RANK), jnp.float32) * math.sqrt(1.0 / F1)
    bp = jnp.zeros((1, RANK), jnp.float32)
    w1 = jax.random.normal(ks[1], (F1, HIDDEN), jnp.float32) * math.sqrt(1.0 / F1)
    b1 = jax.random.normal(ks[2], (1, HIDDEN), jnp.float32) * 0.1
    w2 = jax.random.normal(ks[3], (HIDDEN, OUTDIM), jnp.float32) * math.sqrt(1.0 / HIDDEN)
    b2 = jax.random.normal(ks[4], (1, OUTDIM), jnp.float32) * 0.1
    wq = jax.random.normal(ks[5], (RANK, OUTDIM), jnp.float32) * math.sqrt(1.0 / RANK)
    bq = jax.random.normal(ks[6], (1, OUTDIM), jnp.float32) * 0.1
    params = (wp, bp, w1, b1, w2, b2, wq, bq)

    embedding = jax.random.normal(ks[7], (N_NODES, FEATDIM), jnp.float32)

    out = thnn_forward(embedding, H, params)
    out = jax.block_until_ready(out)

    ref = ref_forward_numpy(embedding, H, params)
    # bf16 elementwise/MXU paths + default-precision wrapper dots vs a float64
    # loopy reference -> use a bf16-appropriate tolerance.
    np.testing.assert_allclose(np.asarray(out), ref, rtol=5e-2, atol=5e-2)
    print("KERNEL_OK")
</pallas_src>

<mosaic_0001>
module attributes {stable_mosaic.version = 11 : i64} {
  func.func @thnn_kernel(%arg0: i32, %arg1: i32, %arg2: memref<16x128xbf16, #tpu.memory_space<vmem>>, %arg3: memref<16x16xbf16, #tpu.memory_space<vmem>>, %arg4: memref<16x16xbf16, #tpu.memory_space<vmem>>, %arg5: memref<16x1xf32, #tpu.memory_space<vmem>>, %arg6: memref<16x128xbf16, #tpu.memory_space<vmem>>, %arg7: memref<16x128xbf16, #tpu.memory_space<vmem>>, %arg8: memref<128x32xbf16, #tpu.memory_space<vmem>>, %arg9: memref<16x32xf32, #tpu.memory_space<vmem>>, %arg10: memref<1x32xf32, #tpu.memory_space<vmem>>, %arg11: memref<16x32xf32, #tpu.memory_space<vmem>>, %arg12: memref<16x16xf32, #tpu.memory_space<vmem>>, %arg13: memref<16x32xf32, #tpu.memory_space<vmem>>) attributes {dimension_semantics = [#tpu.dimension_semantics<parallel>, #tpu.dimension_semantics<arbitrary>], iteration_bounds = array<i64: 1, 1>, scalar_prefetch = 0 : i64, scratch_operands = 2 : i64, tpu.core_type = #tpu.core_type<tc>, window_params = [{transform_indices = @transform_0, window_bounds = array<i64: 16, 128>}, {transform_indices = @transform_1, window_bounds = array<i64: 16, 16>}, {transform_indices = @transform_2, window_bounds = array<i64: 16, 16>}, {transform_indices = @transform_3, window_bounds = array<i64: 16, 1>}, {transform_indices = @transform_4, window_bounds = array<i64: 16, 128>}, {transform_indices = @transform_5, window_bounds = array<i64: 16, 128>}, {transform_indices = @transform_6, window_bounds = array<i64: 128, 32>}, {pipeline_mode = #tpu.pipeline_mode<synchronous>, transform_indices = @transform_7, window_bounds = array<i64: 16, 32>}, {pipeline_mode = #tpu.pipeline_mode<synchronous>, transform_indices = @transform_8, window_bounds = array<i64: 1, 32>}, {transform_indices = @transform_9, window_bounds = array<i64: 16, 32>}]} {
    %c0_i32 = arith.constant 0 : i32
    %0 = arith.cmpi eq, %arg1, %c0_i32 : i32
    %1 = arith.extui %0 : i1 to i32
    %c0_i32_0 = arith.constant 0 : i32
    %2 = arith.cmpi ne, %1, %c0_i32_0 : i32
    scf.if %2 {
      %cst_27 = arith.constant 0.000000e+00 : f32
      %45 = vector.broadcast %cst_27 : f32 to vector<16x16xf32>
      %c0_28 = arith.constant 0 : index
      %c0_29 = arith.constant 0 : index
      %46 = vector.load %arg12[%c0_28, %c0_29] : memref<16x16xf32, #tpu.memory_space<vmem>>, vector<16x16xf32>
      tpu.vector_store %arg12[%c0_28, %c0_29], %45 {strides = array<i32>} : memref<16x16xf32, #tpu.memory_space<vmem>>, vector<16x16xf32>,
      %cst_30 = arith.constant 0.000000e+00 : f32
      %47 = vector.broadcast %cst_30 : f32 to vector<16x32xf32>
      %c0_31 = arith.constant 0 : index
      %c0_32 = arith.constant 0 : index
      %48 = vector.load %arg13[%c0_31, %c0_32] : memref<16x32xf32, #tpu.memory_space<vmem>>, vector<16x32xf32>
      tpu.vector_store %arg13[%c0_31, %c0_32], %47 {strides = array<i32>} : memref<16x32xf32, #tpu.memory_space<vmem>>, vector<16x32xf32>,
    } else {
    }
    %c0 = arith.constant 0 : index
    %c0_1 = arith.constant 0 : index
    %3 = vector.load %arg2[%c0, %c0_1] : memref<16x128xbf16, #tpu.memory_space<vmem>>, vector<16x128xbf16>
    %c0_2 = arith.constant 0 : index
    %c0_3 = arith.constant 0 : index
    %4 = vector.load %arg3[%c0_2, %c0_3] : memref<16x16xbf16, #tpu.memory_space<vmem>>, vector<16x16xbf16>
    %c0_4 = arith.constant 0 : index
    %c0_5 = arith.constant 0 : index
    %5 = vector.load %arg4[%c0_4, %c0_5] : memref<16x16xbf16, #tpu.memory_space<vmem>>, vector<16x16xbf16>
    %c0_6 = arith.constant 0 : index
    %c0_7 = arith.constant 0 : index
    %6 = vector.load %arg6[%c0_6, %c0_7] : memref<16x128xbf16, #tpu.memory_space<vmem>>, vector<16x128xbf16>
    %c0_8 = arith.constant 0 : index
    %c0_9 = arith.constant 0 : index
    %7 = vector.load %arg7[%c0_8, %c0_9] : memref<16x128xbf16, #tpu.memory_space<vmem>>, vector<16x128xbf16>
    %8 = vector.shape_cast %6 : vector<16x128xbf16> to vector<1x16x128xbf16>
    %9 = vector.shape_cast %4 : vector<16x16xbf16> to vector<16x16x1xbf16>
    %10 = vector.broadcast %8 : vector<1x16x128xbf16> to vector<16x16x128xbf16>
    %11 = vector.broadcast %9 : vector<16x16x1xbf16> to vector<16x16x128xbf16>
    %12 = arith.mulf %10, %11 : vector<16x16x128xbf16>
    %13 = vector.shape_cast %7 : vector<16x128xbf16> to vector<1x16x128xbf16>
    %14 = vector.shape_cast %5 : vector<16x16xbf16> to vector<16x16x1xbf16>
    %15 = vector.broadcast %13 : vector<1x16x128xbf16> to vector<16x16x128xbf16>
    %16 = vector.broadcast %14 : vector<16x16x1xbf16> to vector<16x16x128xbf16>
    %17 = arith.subf %15, %16 : vector<16x16x128xbf16>
    %cst = arith.constant 5.000000e-01 : bf16
    %18 = vector.broadcast %cst : bf16 to vector<16x16x128xbf16>
    %19 = arith.cmpf ogt, %17, %18 : vector<16x16x128xbf16>
    %cst_10 = arith.constant 0.000000e+00 : f32
    %20 = arith.truncf %cst_10 : f32 to bf16
    %21 = vector.broadcast %20 : bf16 to vector<16x16x128xbf16>
    %22 = arith.select %19, %21, %12 : vector<16x16x128xi1>, vector<16x16x128xbf16>
    %23 = math.tanh %22 : vector<16x16x128xbf16>
    %24 = vector.shape_cast %3 : vector<16x128xbf16> to vector<16x1x128xbf16>
    %cst_11 = arith.constant 0.000000e+00 : bf16
    %25 = vector.broadcast %cst_11 : bf16 to vector<16x1x128xbf16>
    %26 = arith.cmpf ogt, %24, %25 : vector<16x1x128xbf16>
    %cst_12 = arith.constant 0.000000e+00 : f32
    %27 = arith.truncf %cst_12 : f32 to bf16
    %28 = vector.shape_cast %26 : vector<16x1x128xi1> to vector<16x1x128xi1>
    %29 = vector.broadcast %28 : vector<16x1x128xi1> to vector<16x16x128xi1>
    %30 = vector.broadcast %27 : bf16 to vector<16x16x128xbf16>
    %31 = arith.select %29, %23, %30 : vector<16x16x128xi1>, vector<16x16x128xbf16>
    %c0_13 = arith.constant 0 : index
    %c0_14 = arith.constant 0 : index
    %32 = vector.load %arg12[%c0_13, %c0_14] : memref<16x16xf32, #tpu.memory_space<vmem>>, vector<16x16xf32>
    %33 = arith.extf %31 : vector<16x16x128xbf16> to vector<16x16x128xf32>
    %cst_15 = arith.constant dense<0.000000e+00> : vector<16x16xf32>
    %34 = vector.multi_reduction <add>, %33, %cst_15 [2] : vector<16x16x128xf32> to vector<16x16xf32>
    %35 = arith.addf %32, %34 : vector<16x16xf32>
    %c0_16 = arith.constant 0 : index
    %c0_17 = arith.constant 0 : index
    %36 = vector.load %arg12[%c0_16, %c0_17] : memref<16x16xf32, #tpu.memory_space<vmem>>, vector<16x16xf32>
    tpu.vector_store %arg12[%c0_16, %c0_17], %35 {strides = array<i32>} : memref<16x16xf32, #tpu.memory_space<vmem>>, vector<16x16xf32>,
    %c0_18 = arith.constant 0 : index
    %c0_19 = arith.constant 0 : index
    %37 = vector.load %arg13[%c0_18, %c0_19] : memref<16x32xf32, #tpu.memory_space<vmem>>, vector<16x32xf32>
    %c0_20 = arith.constant 0 : index
    %c0_21 = arith.constant 0 : index
    %38 = vector.load %arg8[%c0_20, %c0_21] : memref<128x32xbf16, #tpu.memory_space<vmem>>, vector<128x32xbf16>
    %cst_22 = arith.constant dense<0.000000e+00> : vector<16x32xf32>
    %39 = tpu.matmul %3, %38, %cst_22 {dimension_numbers = #tpu.dot_dimension_numbers<[1], [0], [0], [1], [0, 0, 1, 1], [], []>} : vector<16x128xbf16>, vector<128x32xbf16>, vector<16x32xf32> -> vector<16x32xf32>
    %40 = arith.addf %37, %39 : vector<16x32xf32>
    %c0_23 = arith.constant 0 : index
    %c0_24 = arith.constant 0 : index
    %41 = vector.load %arg13[%c0_23, %c0_24] : memref<16x32xf32, #tpu.memory_space<vmem>>, vector<16x32xf32>
    tpu.vector_store %arg13[%c0_23, %c0_24], %40 {strides = array<i32>} : memref<16x32xf32, #tpu.memory_space<vmem>>, vector<16x32xf32>,
    %c0_i32_25 = arith.constant 0 : i32
    %42 = arith.cmpi eq, %arg1, %c0_i32_25 : i32
    %43 = arith.extui %42 : i1 to i32
    %c0_i32_26 = arith.constant 0 : i32
    %44 = arith.cmpi ne, %43, %c0_i32_26 : i32
    scf.if %44 {
      %c0_27 = arith.constant 0 : index
      %c0_28 = arith.constant 0 : index
      %45 = vector.load %arg12[%c0_27, %c0_28] : memref<16x16xf32, #tpu.memory_space<vmem>>, vector<16x16xf32>
      %46 = arith.truncf %45 : vector<16x16xf32> to vector<16x16xbf16>
      %c0_29 = arith.constant 0 : index
      %c0_30 = arith.constant 0 : index
      %47 = vector.load %arg9[%c0_29, %c0_30] : memref<16x32xf32, #tpu.memory_space<vmem>>, vector<16x32xf32>
      %48 = arith.truncf %47 : vector<16x32xf32> to vector<16x32xbf16>
      %cst_31 = arith.constant dense<0.000000e+00> : vector<16x32xf32>
      %49 = tpu.matmul %46, %48, %cst_31 {dimension_numbers = #tpu.dot_dimension_numbers<[1], [0], [0], [1], [0, 0, 1, 1], [], []>} : vector<16x16xbf16>, vector<16x32xbf16>, vector<16x32xf32> -> vector<16x32xf32>
      %c0_32 = arith.constant 0 : index
      %c0_33 = arith.constant 0 : index
      %50 = vector.load %arg13[%c0_32, %c0_33] : memref<16x32xf32, #tpu.memory_space<vmem>>, vector<16x32xf32>
      %51 = arith.addf %49, %50 : vector<16x32xf32>
      %c0_34 = arith.constant 0 : index
      %c0_35 = arith.constant 0 : index
      %52 = vector.load %arg5[%c0_34, %c0_35] : memref<16x1xf32, #tpu.memory_space<vmem>>, vector<16x1xf32>
      %53 = vector.broadcast %52 : vector<16x1xf32> to vector<16x32xf32>
      %54 = arith.mulf %51, %53 : vector<16x32xf32>
      %c0_36 = arith.constant 0 : index
      %c0_37 = arith.constant 0 : index
      %55 = vector.load %arg10[%c0_36, %c0_37] : memref<1x32xf32, #tpu.memory_space<vmem>>, vector<1x32xf32>
      %56 = vector.broadcast %55 : vector<1x32xf32> to vector<16x32xf32>
      %57 = arith.addf %54, %56 : vector<16x32xf32>
      %cst_38 = arith.constant 0.000000e+00 : f32
      %58 = vector.broadcast %cst_38 : f32 to vector<16x32xf32>
      %59 = arith.maximumf %57, %58 : vector<16x32xf32>
      %c0_39 = arith.constant 0 : index
      %c0_40 = arith.constant 0 : index
      %60 = vector.load %arg11[%c0_39, %c0_40] : memref<16x32xf32, #tpu.memory_space<vmem>>, vector<16x32xf32>
      tpu.vector_store %arg11[%c0_39, %c0_40], %59 {strides = array<i32>} : memref<16x32xf32, #tpu.memory_space<vmem>>, vector<16x32xf32>,
    } else {
    }
    return
  }
  func.func @transform_0(%arg0: i32, %arg1: i32) -> (i32, i32) {
    %c0_i32 = arith.constant 0 : i32
    return %arg0, %arg1 : i32, i32
  }
  func.func @transform_1(%arg0: i32, %arg1: i32) -> (i32, i32) {
    %c0_i32 = arith.constant 0 : i32
    %c0_i32_0 = arith.constant 0 : i32
    return %arg0, %c0_i32 : i32, i32
  }
  func.func @transform_2(%arg0: i32, %arg1: i32) -> (i32, i32) {
    %c0_i32 = arith.constant 0 : i32
    %c0_i32_0 = arith.constant 0 : i32
    return %arg0, %c0_i32 : i32, i32
  }
  func.func @transform_3(%arg0: i32, %arg1: i32) -> (i32, i32) {
    %c0_i32 = arith.constant 0 : i32
    %c0_i32_0 = arith.constant 0 : i32
    return %arg0, %c0_i32 : i32, i32
  }
  func.func @transform_4(%arg0: i32, %arg1: i32) -> (i32, i32) {
    %c0_i32 = arith.constant 0 : i32
    %c0_i32_0 = arith.constant 0 : i32
    return %c0_i32, %arg1 : i32, i32
  }
  func.func @transform_5(%arg0: i32, %arg1: i32) -> (i32, i32) {
    %c0_i32 = arith.constant 0 : i32
    %c0_i32_0 = arith.constant 0 : i32
    return %c0_i32, %arg1 : i32, i32
  }
  func.func @transform_6(%arg0: i32, %arg1: i32) -> (i32, i32) {
    %c0_i32 = arith.constant 0 : i32
    %c0_i32_0 = arith.constant 0 : i32
    return %arg1, %c0_i32 : i32, i32
  }
  func.func @transform_7(%arg0: i32, %arg1: i32) -> (i32, i32) {
    %c0_i32 = arith.constant 0 : i32
    %c0_i32_0 = arith.constant 0 : i32
    %c0_i32_1 = arith.constant 0 : i32
    return %c0_i32, %c0_i32_0 : i32, i32
  }
  func.func @transform_8(%arg0: i32, %arg1: i32) -> (i32, i32) {
    %c0_i32 = arith.constant 0 : i32
    %c0_i32_0 = arith.constant 0 : i32
    %c0_i32_1 = arith.constant 0 : i32
    return %c0_i32, %c0_i32_0 : i32, i32
  }
  func.func @transform_9(%arg0: i32, %arg1: i32) -> (i32, i32) {
    %c0_i32 = arith.constant 0 : i32
    %c0_i32_0 = arith.constant 0 : i32
    return %arg0, %c0_i32 : i32, i32
  }
}

</mosaic_0001>

<llo_original>
// kernel: tpu_custom_call.1
$region0: #{tpu_custom_call.1}
  #allocation0 [shape = 'u32[]', space=smem, size = 0x4, offset = 0x4, fixed_abs, tag = 'smem constant byte address 0x4 - core index']
  #allocation1 [shape = 'u32[144,128]{1,0:T(1,128)}', space=vmem, size = 0x12000, scoped, tag = 'internal scratch']
  #allocation2 [shape = 'f32[16,16]{1,0:T(8,128)}', space=vmem, size = 0x2000, scoped, tag = 'scratch operand']
  #allocation3 [shape = 'f32[16,32]{1,0:T(8,128)}', space=vmem, size = 0x2000, scoped, tag = 'scratch operand']
  %s0 = inlined_call_operand.vmem [shape: bf16[16,128], index: 0, kind: input, shape index: {}]
  %s1 = inlined_call_operand.vmem [shape: bf16[16,16], index: 1, kind: input, shape index: {}]
  %s2 = inlined_call_operand.vmem [shape: bf16[16,16], index: 2, kind: input, shape index: {}]
  %s3 = inlined_call_operand.vmem [shape: f32[16,1], index: 3, kind: input, shape index: {}]
  %s4 = inlined_call_operand.vmem [shape: bf16[16,128], index: 4, kind: input, shape index: {}]
  %s5 = inlined_call_operand.vmem [shape: bf16[16,128], index: 5, kind: input, shape index: {}]
  %s6 = inlined_call_operand.vmem [shape: bf16[128,32], index: 6, kind: input, shape index: {}]
  %s7 = inlined_call_operand.vmem [shape: f32[16,32], index: 7, kind: input, shape index: {}]
  %s8 = inlined_call_operand.vmem [shape: f32[1,32], index: 8, kind: input, shape index: {}]
  %s9 = inlined_call_operand.hbm [shape: f32[16,32], index: 9, kind: output, shape index: {}]
  %s10 = sld [smem:[#allocation0]]
  $region54: #{tpu_custom_call.1} parent=0
    _
  %s12 = ssub.s32 1, %s10
  %s13 = scalar_select 0, %s12, %s10
  $region1: #{tpu_custom_call.1} parent=0
    #allocation4 [shape = 'u8[8192]{0}', space=vmem, size = 0x2000, scoped, tag = 'output window, operand 0, single buffered']
    #allocation5 [shape = 's32[1]{0}', space=sflag, size = 0x4, scoped, tag = 'scoped memory for tpu_custom_call.1']
    %14 = vsyncpa [#allocation5], 0
    // Predicated region
    $region2: #{tpu_custom_call.1} parent=1 // pred_check
      _
    $region3: #{tpu_custom_call.1} parent=1 // pred_check_branch
      %16 = sbr.rel (0) target = $region5
    $region4: #{tpu_custom_call.1} parent=1 // pred_region
      _
    $region5: #{tpu_custom_call.1} parent=1 // pred_fallthru
      _
    // Predicated region
    $region6: #{tpu_custom_call.1} parent=1 // pred_check
      _
    $region7: #{tpu_custom_call.1} parent=1 // pred_check_branch
      %18 = sbr.rel (0) target = $region9
    $region8: #{tpu_custom_call.1} parent=1 // pred_region
      _
    $region9: #{tpu_custom_call.1} parent=1 // pred_fallthru
      _
    // Predicated region
    $region10: #{tpu_custom_call.1} parent=1 // pred_check
      _
    $region11: #{tpu_custom_call.1} parent=1 // pred_check_branch
      %20 = sbr.rel (0) target = $region13
    $region12: #{tpu_custom_call.1} parent=1 // pred_region
      _
    $region13: #{tpu_custom_call.1} parent=1 // pred_fallthru
      _
    // Predicated region
    $region14: #{tpu_custom_call.1} parent=1 // pred_check
      _
    $region15: #{tpu_custom_call.1} parent=1 // pred_check_branch
      %22 = sbr.rel (0) target = $region17
    $region16: #{tpu_custom_call.1} parent=1 // pred_region
      _
    $region17: #{tpu_custom_call.1} parent=1 // pred_fallthru
      _
    // Predicated region
    $region18: #{tpu_custom_call.1} parent=1 // pred_check
      _
    $region19: #{tpu_custom_call.1} parent=1 // pred_check_branch
      %24 = sbr.rel (0) target = $region21
    $region20: #{tpu_custom_call.1} parent=1 // pred_region
      _
    $region21: #{tpu_custom_call.1} parent=1 // pred_fallthru
      _
    // Predicated region
    $region22: #{tpu_custom_call.1} parent=1 // pred_check
      _
    $region23: #{tpu_custom_call.1} parent=1 // pred_check_branch
      %26 = sbr.rel (0) target = $region25
    $region24: #{tpu_custom_call.1} parent=1 // pred_region
      _
    $region25: #{tpu_custom_call.1} parent=1 // pred_fallthru
      _
    // Predicated region
    $region26: #{tpu_custom_call.1} parent=1 // pred_check
      _
    $region27: #{tpu_custom_call.1} parent=1 // pred_check_branch
      %28 = sbr.rel (0) target = $region29
    $region28: #{tpu_custom_call.1} parent=1 // pred_region
      _
    $region29: #{tpu_custom_call.1} parent=1 // pred_fallthru
      _
    // Predicated region
    $region30: #{tpu_custom_call.1} parent=1 // pred_check
      _
    $region31: #{tpu_custom_call.1} parent=1 // pred_check_branch
      %30 = sbr.rel (0) target = $region33
    $region32: #{tpu_custom_call.1} parent=1 // pred_region
      _
    $region33: #{tpu_custom_call.1} parent=1 // pred_fallthru
      _
    // Predicated region
    $region34: #{tpu_custom_call.1} parent=1 // pred_check
      _
    $region35: #{tpu_custom_call.1} parent=1 // pred_check_branch
      %32 = sbr.rel (0) target = $region37
    $region36: #{tpu_custom_call.1} parent=1 // pred_region
      _
    $region37: #{tpu_custom_call.1} parent=1 // pred_fallthru
      _
    %p37 = scmp.eq.s32.totalorder 0, 0
    // Predicated region
    $region38: #{tpu_custom_call.1} parent=1 // pred_check
      %p38 = pneg %p37
    $region39: #{tpu_custom_call.1} parent=1 // pred_check_branch
      %40 = sbr.rel (%p38) target = $region41
    $region40: #{tpu_custom_call.1} parent=1 // pred_region
      %vm41 = vcmask 130048
      %42 = vst.msk [vmem:[#allocation2] sm:$0xff] %vm41, 0.0
      %43 = vst.msk [vmem:[#allocation2 + $0x8] sm:$0xff] %vm41, 0.0
      %vm44 = vcmask 261120
      %45 = vst.msk [vmem:[#allocation3] sm:$0xff] %vm44, 0.0
      %46 = vst.msk [vmem:[#allocation3 + $0x8] sm:$0xff] %vm44, 0.0
    $region41: #{tpu_custom_call.1} parent=1 // pred_fallthru
      _
    %v47 = vld [vmem:[%s0] sm:$0xf]
    %v48 = vld [vmem:[%s0 + $0x4] sm:$0xf]
    %v49 = vld [vmem:[%s1] sm:$0xf]
    %v50 = vld [vmem:[%s1 + $0x4] sm:$0xf]
    %v51 = vld [vmem:[%s2] sm:$0xf]
    %v52 = vld [vmem:[%s2 + $0x4] sm:$0xf]
    %v53 = vld [vmem:[%s4] sm:$0xf]
    %v54 = vld [vmem:[%s4 + $0x4] sm:$0xf]
    %v55 = vld [vmem:[%s5] sm:$0xf]
    %v56 = vld [vmem:[%s5 + $0x4] sm:$0xf]
    %v59 = vunpack.c.l.b16 %v49
    %v60 = vunpack.c.l.b16 %v50
    %v61 = vpack.c.b16 %v60, %v59
    %v63 = vpack.i.b16 %v61, %v61
    %v65 = vlaneseq
    %v66 = vshrl.u32 %v65, 7
    %v67 = vsub.s32 0, %v66
    %v68 = vrot.slane %v63, %v67
    %70 = vbcast.lane.c.b16.xlu0 %v68, 256
    %v71 = vpop.permute.xlu0 %70
    %v72 = vshrl.u32 %v61, 16
    %v73 = vpack.i.b16 %v72, %v72
    %v75 = vlaneseq
    %v76 = vshrl.u32 %v75, 7
    %v77 = vsub.s32 0, %v76
    %v78 = vrot.slane %v73, %v77
    %80 = vbcast.lane.c.b16.xlu0 %v78, 256
    %v81 = vpop.permute.xlu0 %80
    %v82 = vlaneseq
    %v83 = vshrl.u32 %v82, 7
    %v84 = vsub.s32 1, %v83
    %v85 = vrot.slane %v63, %v84
    %87 = vbcast.lane.c.b16.xlu0 %v85, 256
    %v88 = vpop.permute.xlu0 %87
    %v89 = vlaneseq
    %v90 = vshrl.u32 %v89, 7
    %v91 = vsub.s32 1, %v90
    %v92 = vrot.slane %v73, %v91
    %94 = vbcast.lane.c.b16.xlu0 %v92, 256
    %v95 = vpop.permute.xlu0 %94
    %v96 = vlaneseq
    %v97 = vshrl.u32 %v96, 7
    %v98 = vsub.s32 2, %v97
    %v99 = vrot.slane %v63, %v98
    %101 = vbcast.lane.c.b16.xlu0 %v99, 256
    %v102 = vpop.permute.xlu0 %101
    %v103 = vlaneseq
    %v104 = vshrl.u32 %v103, 7
    %v105 = vsub.s32 2, %v104
    %v106 = vrot.slane %v73, %v105
    %108 = vbcast.lane.c.b16.xlu0 %v106, 256
    %v109 = vpop.permute.xlu0 %108
    %v110 = vlaneseq
    %v111 = vshrl.u32 %v110, 7
    %v112 = vsub.s32 3, %v111
    %v113 = vrot.slane %v63, %v112
    %115 = vbcast.lane.c.b16.xlu0 %v113, 256
    %v116 = vpop.permute.xlu0 %115
    %v117 = vlaneseq
    %v118 = vshrl.u32 %v117, 7
    %v119 = vsub.s32 3, %v118
    %v120 = vrot.slane %v73, %v119
    %122 = vbcast.lane.c.b16.xlu0 %v120, 256
    %v123 = vpop.permute.xlu0 %122
    %v124 = vlaneseq
    %v125 = vshrl.u32 %v124, 7
    %v126 = vsub.s32 4, %v125
    %v127 = vrot.slane %v63, %v126
    %129 = vbcast.lane.c.b16.xlu0 %v127, 256
    %v130 = vpop.permute.xlu0 %129
    %v131 = vlaneseq
    %v132 = vshrl.u32 %v131, 7
    %v133 = vsub.s32 4, %v132
    %v134 = vrot.slane %v73, %v133
    %136 = vbcast.lane.c.b16.xlu0 %v134, 256
    %v137 = vpop.permute.xlu0 %136
    %v138 = vlaneseq
    %v139 = vshrl.u32 %v138, 7
    %v140 = vsub.s32 5, %v139
    %v141 = vrot.slane %v63, %v140
    %143 = vbcast.lane.c.b16.xlu0 %v141, 256
    %v144 = vpop.permute.xlu0 %143
    %v145 = vlaneseq
    %v146 = vshrl.u32 %v145, 7
    %v147 = vsub.s32 5, %v146
    %v148 = vrot.slane %v73, %v147
    %150 = vbcast.lane.c.b16.xlu0 %v148, 256
    %v151 = vpop.permute.xlu0 %150
    %v152 = vlaneseq
    %v153 = vshrl.u32 %v152, 7
    %v154 = vsub.s32 6, %v153
    %v155 = vrot.slane %v63, %v154
    %157 = vbcast.lane.c.b16.xlu0 %v155, 256
    %v158 = vpop.permute.xlu0 %157
    %v159 = vlaneseq
    %v160 = vshrl.u32 %v159, 7
    %v161 = vsub.s32 6, %v160
    %v162 = vrot.slane %v73, %v161
    %164 = vbcast.lane.c.b16.xlu0 %v162, 256
    %v165 = vpop.permute.xlu0 %164
    %v166 = vlaneseq
    %v167 = vshrl.u32 %v166, 7
    %v168 = vsub.s32 7, %v167
    %v169 = vrot.slane %v63, %v168
    %171 = vbcast.lane.c.b16.xlu0 %v169, 256
    %v172 = vpop.permute.xlu0 %171
    %v173 = vlaneseq
    %v174 = vshrl.u32 %v173, 7
    %v175 = vsub.s32 7, %v174
    %v176 = vrot.slane %v73, %v175
    %178 = vbcast.lane.c.b16.xlu0 %v176, 256
    %v179 = vpop.permute.xlu0 %178
    %v197 = vunpack.c.l.s4 839922192
    %v198 = vunpack.c.0.s8 %v197
    %v199 = vlaneseq
    %v200 = vshrl.u32 %v199, 7
    %v201 = vsub.s32 %v198, %v200
    %v202 = vrot.slane %v71, %v201
    %v204 = vunpack.c.l.s4 1985246804
    %v205 = vunpack.c.0.s8 %v204
    %v206 = vlaneseq
    %v207 = vshrl.u32 %v206, 7
    %v208 = vsub.s32 %v205, %v207
    %v209 = vrot.slane %v71, %v208
    %v211 = vunpack.c.l.s4 839922192
    %v212 = vunpack.c.0.s8 %v211
    %v213 = vlaneseq
    %v214 = vshrl.u32 %v213, 7
    %v215 = vsub.s32 %v212, %v214
    %v216 = vrot.slane %v81, %v215
    %v218 = vunpack.c.l.s4 1985246804
    %v219 = vunpack.c.0.s8 %v218
    %v220 = vlaneseq
    %v221 = vshrl.u32 %v220, 7
    %v222 = vsub.s32 %v219, %v221
    %v223 = vrot.slane %v81, %v222
    %v225 = vunpack.c.l.s4 839922192
    %v226 = vunpack.c.0.s8 %v225
    %v227 = vlaneseq
    %v228 = vshrl.u32 %v227, 7
    %v229 = vsub.s32 %v226, %v228
    %v230 = vrot.slane %v88, %v229
    %v232 = vunpack.c.l.s4 1985246804
    %v233 = vunpack.c.0.s8 %v232
    %v234 = vlaneseq
    %v235 = vshrl.u32 %v234, 7
    %v236 = vsub.s32 %v233, %v235
    %v237 = vrot.slane %v88, %v236
    %v239 = vunpack.c.l.s4 839922192
    %v240 = vunpack.c.0.s8 %v239
    %v241 = vlaneseq
    %v242 = vshrl.u32 %v241, 7
    %v243 = vsub.s32 %v240, %v242
    %v244 = vrot.slane %v95, %v243
    %v246 = vunpack.c.l.s4 1985246804
    %v247 = vunpack.c.0.s8 %v246
    %v248 = vlaneseq
    %v249 = vshrl.u32 %v248, 7
    %v250 = vsub.s32 %v247, %v249
    %v251 = vrot.slane %v95, %v250
    %v253 = vunpack.c.l.s4 839922192
    %v254 = vunpack.c.0.s8 %v253
    %v255 = vlaneseq
    %v256 = vshrl.u32 %v255, 7
    %v257 = vsub.s32 %v254, %v256
    %v258 = vrot.slane %v102, %v257
    %v260 = vunpack.c.l.s4 1985246804
    %v261 = vunpack.c.0.s8 %v260
    %v262 = vlaneseq
    %v263 = vshrl.u32 %v262, 7
    %v264 = vsub.s32 %v261, %v263
    %v265 = vrot.slane %v102, %v264
    %v267 = vunpack.c.l.s4 839922192
    %v268 = vunpack.c.0.s8 %v267
    %v269 = vlaneseq
    %v270 = vshrl.u32 %v269, 7
    %v271 = vsub.s32 %v268, %v270
    %v272 = vrot.slane %v109, %v271
    %v274 = vunpack.c.l.s4 1985246804
    %v275 = vunpack.c.0.s8 %v274
    %v276 = vlaneseq
    %v277 = vshrl.u32 %v276, 7
    %v278 = vsub.s32 %v275, %v277
    %v279 = vrot.slane %v109, %v278
    %v281 = vunpack.c.l.s4 839922192
    %v282 = vunpack.c.0.s8 %v281
    %v283 = vlaneseq
    %v284 = vshrl.u32 %v283, 7
    %v285 = vsub.s32 %v282, %v284
    %v286 = vrot.slane %v116, %v285
    %v288 = vunpack.c.l.s4 1985246804
    %v289 = vunpack.c.0.s8 %v288
    %v290 = vlaneseq
    %v291 = vshrl.u32 %v290, 7
    %v292 = vsub.s32 %v289, %v291
    %v293 = vrot.slane %v116, %v292
    %v295 = vunpack.c.l.s4 839922192
    %v296 = vunpack.c.0.s8 %v295
    %v297 = vlaneseq
    %v298 = vshrl.u32 %v297, 7
    %v299 = vsub.s32 %v296, %v298
    %v300 = vrot.slane %v123, %v299
    %v302 = vunpack.c.l.s4 1985246804
    %v303 = vunpack.c.0.s8 %v302
    %v304 = vlaneseq
    %v305 = vshrl.u32 %v304, 7
    %v306 = vsub.s32 %v303, %v305
    %v307 = vrot.slane %v123, %v306
    %v309 = vunpack.c.l.s4 839922192
    %v310 = vunpack.c.0.s8 %v309
    %v311 = vlaneseq
    %v312 = vshrl.u32 %v311, 7
    %v313 = vsub.s32 %v310, %v312
    %v314 = vrot.slane %v130, %v313
    %v316 = vunpack.c.l.s4 1985246804
    %v317 = vunpack.c.0.s8 %v316
    %v318 = vlaneseq
    %v319 = vshrl.u32 %v318, 7
    %v320 = vsub.s32 %v317, %v319
    %v321 = vrot.slane %v130, %v320
    %v323 = vunpack.c.l.s4 839922192
    %v324 = vunpack.c.0.s8 %v323
    %v325 = vlaneseq
    %v326 = vshrl.u32 %v325, 7
    %v327 = vsub.s32 %v324, %v326
    %v328 = vrot.slane %v137, %v327
    %v330 = vunpack.c.l.s4 1985246804
    %v331 = vunpack.c.0.s8 %v330
    %v332 = vlaneseq
    %v333 = vshrl.u32 %v332, 7
    %v334 = vsub.s32 %v331, %v333
    %v335 = vrot.slane %v137, %v334
    %v337 = vunpack.c.l.s4 839922192
    %v338 = vunpack.c.0.s8 %v337
    %v339 = vlaneseq
    %v340 = vshrl.u32 %v339, 7
    %v341 = vsub.s32 %v338, %v340
    %v342 = vrot.slane %v144, %v341
    %v344 = vunpack.c.l.s4 1985246804
    %v345 = vunpack.c.0.s8 %v344
    %v346 = vlaneseq
    %v347 = vshrl.u32 %v346, 7
    %v348 = vsub.s32 %v345, %v347
    %v349 = vrot.slane %v144, %v348
    %v351 = vunpack.c.l.s4 839922192
    %v352 = vunpack.c.0.s8 %v351
    %v353 = vlaneseq
    %v354 = vshrl.u32 %v353, 7
    %v355 = vsub.s32 %v352, %v354
    %v356 = vrot.slane %v151, %v355
    %v358 = vunpack.c.l.s4 1985246804
    %v359 = vunpack.c.0.s8 %v358
    %v360 = vlaneseq
    %v361 = vshrl.u32 %v360, 7
    %v362 = vsub.s32 %v359, %v361
    %v363 = vrot.slane %v151, %v362
    %v365 = vunpack.c.l.s4 839922192
    %v366 = vunpack.c.0.s8 %v365
    %v367 = vlaneseq
    %v368 = vshrl.u32 %v367, 7
    %v369 = vsub.s32 %v366, %v368
    %v370 = vrot.slane %v158, %v369
    %v372 = vunpack.c.l.s4 1985246804
    %v373 = vunpack.c.0.s8 %v372
    %v374 = vlaneseq
    %v375 = vshrl.u32 %v374, 7
    %v376 = vsub.s32 %v373, %v375
    %v377 = vrot.slane %v158, %v376
    %v379 = vunpack.c.l.s4 839922192
    %v380 = vunpack.c.0.s8 %v379
    %v381 = vlaneseq
    %v382 = vshrl.u32 %v381, 7
    %v383 = vsub.s32 %v380, %v382
    %v384 = vrot.slane %v165, %v383
    %v386 = vunpack.c.l.s4 1985246804
    %v387 = vunpack.c.0.s8 %v386
    %v388 = vlaneseq
    %v389 = vshrl.u32 %v388, 7
    %v390 = vsub.s32 %v387, %v389
    %v391 = vrot.slane %v165, %v390
    %v393 = vunpack.c.l.s4 839922192
    %v394 = vunpack.c.0.s8 %v393
    %v395 = vlaneseq
    %v396 = vshrl.u32 %v395, 7
    %v397 = vsub.s32 %v394, %v396
    %v398 = vrot.slane %v172, %v397
    %v400 = vunpack.c.l.s4 1985246804
    %v401 = vunpack.c.0.s8 %v400
    %v402 = vlaneseq
    %v403 = vshrl.u32 %v402, 7
    %v404 = vsub.s32 %v401, %v403
    %v405 = vrot.slane %v172, %v404
    %v407 = vunpack.c.l.s4 839922192
    %v408 = vunpack.c.0.s8 %v407
    %v409 = vlaneseq
    %v410 = vshrl.u32 %v409, 7
    %v411 = vsub.s32 %v408, %v410
    %v412 = vrot.slane %v179, %v411
    %v414 = vunpack.c.l.s4 1985246804
    %v415 = vunpack.c.0.s8 %v414
    %v416 = vlaneseq
    %v417 = vshrl.u32 %v416, 7
    %v418 = vsub.s32 %v415, %v417
    %v419 = vrot.slane %v179, %v418
    %v452 = vmul.bf16 %v53, %v202
    %v453 = vmul.bf16 %v54, %v209
    %v454 = vmul.bf16 %v53, %v216
    %v455 = vmul.bf16 %v54, %v223
    %v456 = vmul.bf16 %v53, %v230
    %v457 = vmul.bf16 %v54, %v237
    %v458 = vmul.bf16 %v53, %v244
    %v459 = vmul.bf16 %v54, %v251
    %v460 = vmul.bf16 %v53, %v258
    %v461 = vmul.bf16 %v54, %v265
    %v462 = vmul.bf16 %v53, %v272
    %v463 = vmul.bf16 %v54, %v279
    %v464 = vmul.bf16 %v53, %v286
    %v465 = vmul.bf16 %v54, %v293
    %v466 = vmul.bf16 %v53, %v300
    %v467 = vmul.bf16 %v54, %v307
    %v468 = vmul.bf16 %v53, %v314
    %v469 = vmul.bf16 %v54, %v321
    %v470 = vmul.bf16 %v53, %v328
    %v471 = vmul.bf16 %v54, %v335
    %v472 = vmul.bf16 %v53, %v342
    %v473 = vmul.bf16 %v54, %v349
    %v474 = vmul.bf16 %v53, %v356
    %v475 = vmul.bf16 %v54, %v363
    %v476 = vmul.bf16 %v53, %v370
    %v477 = vmul.bf16 %v54, %v377
    %v478 = vmul.bf16 %v53, %v384
    %v479 = vmul.bf16 %v54, %v391
    %v480 = vmul.bf16 %v53, %v398
    %v481 = vmul.bf16 %v54, %v405
    %v482 = vmul.bf16 %v53, %v412
    %v483 = vmul.bf16 %v54, %v419
    %v486 = vunpack.c.l.b16 %v51
    %v487 = vunpack.c.l.b16 %v52
    %v488 = vpack.c.b16 %v487, %v486
    %v490 = vpack.i.b16 %v488, %v488
    %v492 = vlaneseq
    %v493 = vshrl.u32 %v492, 7
    %v494 = vsub.s32 0, %v493
    %v495 = vrot.slane %v490, %v494
    %497 = vbcast.lane.c.b16.xlu0 %v495, 256
    %v498 = vpop.permute.xlu0 %497
    %v499 = vshrl.u32 %v488, 16
    %v500 = vpack.i.b16 %v499, %v499
    %v502 = vlaneseq
    %v503 = vshrl.u32 %v502, 7
    %v504 = vsub.s32 0, %v503
    %v505 = vrot.slane %v500, %v504
    %507 = vbcast.lane.c.b16.xlu0 %v505, 256
    %v508 = vpop.permute.xlu0 %507
    %v509 = vlaneseq
    %v510 = vshrl.u32 %v509, 7
    %v511 = vsub.s32 1, %v510
    %v512 = vrot.slane %v490, %v511
    %514 = vbcast.lane.c.b16.xlu0 %v512, 256
    %v515 = vpop.permute.xlu0 %514
    %v516 = vlaneseq
    %v517 = vshrl.u32 %v516, 7
    %v518 = vsub.s32 1, %v517
    %v519 = vrot.slane %v500, %v518
    %521 = vbcast.lane.c.b16.xlu0 %v519, 256
    %v522 = vpop.permute.xlu0 %521
    %v523 = vlaneseq
    %v524 = vshrl.u32 %v523, 7
    %v525 = vsub.s32 2, %v524
    %v526 = vrot.slane %v490, %v525
    %528 = vbcast.lane.c.b16.xlu0 %v526, 256
    %v529 = vpop.permute.xlu0 %528
    %v530 = vlaneseq
    %v531 = vshrl.u32 %v530, 7
    %v532 = vsub.s32 2, %v531
    %v533 = vrot.slane %v500, %v532
    %535 = vbcast.lane.c.b16.xlu0 %v533, 256
    %v536 = vpop.permute.xlu0 %535
    %v537 = vlaneseq
    %v538 = vshrl.u32 %v537, 7
    %v539 = vsub.s32 3, %v538
    %v540 = vrot.slane %v490, %v539
    %542 = vbcast.lane.c.b16.xlu0 %v540, 256
    %v543 = vpop.permute.xlu0 %542
    %v544 = vlaneseq
    %v545 = vshrl.u32 %v544, 7
    %v546 = vsub.s32 3, %v545
    %v547 = vrot.slane %v500, %v546
    %549 = vbcast.lane.c.b16.xlu0 %v547, 256
    %v550 = vpop.permute.xlu0 %549
    %v551 = vlaneseq
    %v552 = vshrl.u32 %v551, 7
    %v553 = vsub.s32 4, %v552
    %v554 = vrot.slane %v490, %v553
    %556 = vbcast.lane.c.b16.xlu0 %v554, 256
    %v557 = vpop.permute.xlu0 %556
    %v558 = vlaneseq
    %v559 = vshrl.u32 %v558, 7
    %v560 = vsub.s32 4, %v559
    %v561 = vrot.slane %v500, %v560
    %563 = vbcast.lane.c.b16.xlu0 %v561, 256
    %v564 = vpop.permute.xlu0 %563
    %v565 = vlaneseq
    %v566 = vshrl.u32 %v565, 7
    %v567 = vsub.s32 5, %v566
    %v568 = vrot.slane %v490, %v567
    %570 = vbcast.lane.c.b16.xlu0 %v568, 256
    %v571 = vpop.permute.xlu0 %570
    %v572 = vlaneseq
    %v573 = vshrl.u32 %v572, 7
    %v574 = vsub.s32 5, %v573
    %v575 = vrot.slane %v500, %v574
    %577 = vbcast.lane.c.b16.xlu0 %v575, 256
    %v578 = vpop.permute.xlu0 %577
    %v579 = vlaneseq
    %v580 = vshrl.u32 %v579, 7
    %v581 = vsub.s32 6, %v580
    %v582 = vrot.slane %v490, %v581
    %584 = vbcast.lane.c.b16.xlu0 %v582, 256
    %v585 = vpop.permute.xlu0 %584
    %v586 = vlaneseq
    %v587 = vshrl.u32 %v586, 7
    %v588 = vsub.s32 6, %v587
    %v589 = vrot.slane %v500, %v588
    %591 = vbcast.lane.c.b16.xlu0 %v589, 256
    %v592 = vpop.permute.xlu0 %591
    %v593 = vlaneseq
    %v594 = vshrl.u32 %v593, 7
    %v595 = vsub.s32 7, %v594
    %v596 = vrot.slane %v490, %v595
    %598 = vbcast.lane.c.b16.xlu0 %v596, 256
    %v599 = vpop.permute.xlu0 %598
    %v600 = vlaneseq
    %v601 = vshrl.u32 %v600, 7
    %v602 = vsub.s32 7, %v601
    %v603 = vrot.slane %v500, %v602
    %605 = vbcast.lane.c.b16.xlu0 %v603, 256
    %v606 = vpop.permute.xlu0 %605
    %v624 = vunpack.c.l.s4 839922192
    %v625 = vunpack.c.0.s8 %v624
    %v626 = vlaneseq
    %v627 = vshrl.u32 %v626, 7
    %v628 = vsub.s32 %v625, %v627
    %v629 = vrot.slane %v498, %v628
    %v631 = vunpack.c.l.s4 1985246804
    %v632 = vunpack.c.0.s8 %v631
    %v633 = vlaneseq
    %v634 = vshrl.u32 %v633, 7
    %v635 = vsub.s32 %v632, %v634
    %v636 = vrot.slane %v498, %v635
    %v638 = vunpack.c.l.s4 839922192
    %v639 = vunpack.c.0.s8 %v638
    %v640 = vlaneseq
    %v641 = vshrl.u32 %v640, 7
    %v642 = vsub.s32 %v639, %v641
    %v643 = vrot.slane %v508, %v642
    %v645 = vunpack.c.l.s4 1985246804
    %v646 = vunpack.c.0.s8 %v645
    %v647 = vlaneseq
    %v648 = vshrl.u32 %v647, 7
    %v649 = vsub.s32 %v646, %v648
    %v650 = vrot.slane %v508, %v649
    %v652 = vunpack.c.l.s4 839922192
    %v653 = vunpack.c.0.s8 %v652
    %v654 = vlaneseq
    %v655 = vshrl.u32 %v654, 7
    %v656 = vsub.s32 %v653, %v655
    %v657 = vrot.slane %v515, %v656
    %v659 = vunpack.c.l.s4 1985246804
    %v660 = vunpack.c.0.s8 %v659
    %v661 = vlaneseq
    %v662 = vshrl.u32 %v661, 7
    %v663 = vsub.s32 %v660, %v662
    %v664 = vrot.slane %v515, %v663
    %v666 = vunpack.c.l.s4 839922192
    %v667 = vunpack.c.0.s8 %v666
    %v668 = vlaneseq
    %v669 = vshrl.u32 %v668, 7
    %v670 = vsub.s32 %v667, %v669
    %v671 = vrot.slane %v522, %v670
    %v673 = vunpack.c.l.s4 1985246804
    %v674 = vunpack.c.0.s8 %v673
    %v675 = vlaneseq
    %v676 = vshrl.u32 %v675, 7
    %v677 = vsub.s32 %v674, %v676
    %v678 = vrot.slane %v522, %v677
    %v680 = vunpack.c.l.s4 839922192
    %v681 = vunpack.c.0.s8 %v680
    %v682 = vlaneseq
    %v683 = vshrl.u32 %v682, 7
    %v684 = vsub.s32 %v681, %v683
    %v685 = vrot.slane %v529, %v684
    %v687 = vunpack.c.l.s4 1985246804
    %v688 = vunpack.c.0.s8 %v687
    %v689 = vlaneseq
    %v690 = vshrl.u32 %v689, 7
    %v691 = vsub.s32 %v688, %v690
    %v692 = vrot.slane %v529, %v691
    %v694 = vunpack.c.l.s4 839922192
    %v695 = vunpack.c.0.s8 %v694
    %v696 = vlaneseq
    %v697 = vshrl.u32 %v696, 7
    %v698 = vsub.s32 %v695, %v697
    %v699 = vrot.slane %v536, %v698
    %v701 = vunpack.c.l.s4 1985246804
    %v702 = vunpack.c.0.s8 %v701
    %v703 = vlaneseq
    %v704 = vshrl.u32 %v703, 7
    %v705 = vsub.s32 %v702, %v704
    %v706 = vrot.slane %v536, %v705
    %v708 = vunpack.c.l.s4 839922192
    %v709 = vunpack.c.0.s8 %v708
    %v710 = vlaneseq
    %v711 = vshrl.u32 %v710, 7
    %v712 = vsub.s32 %v709, %v711
    %v713 = vrot.slane %v543, %v712
    %v715 = vunpack.c.l.s4 1985246804
    %v716 = vunpack.c.0.s8 %v715
    %v717 = vlaneseq
    %v718 = vshrl.u32 %v717, 7
    %v719 = vsub.s32 %v716, %v718
    %v720 = vrot.slane %v543, %v719
    %v722 = vunpack.c.l.s4 839922192
    %v723 = vunpack.c.0.s8 %v722
    %v724 = vlaneseq
    %v725 = vshrl.u32 %v724, 7
    %v726 = vsub.s32 %v723, %v725
    %v727 = vrot.slane %v550, %v726
    %v729 = vunpack.c.l.s4 1985246804
    %v730 = vunpack.c.0.s8 %v729
    %v731 = vlaneseq
    %v732 = vshrl.u32 %v731, 7
    %v733 = vsub.s32 %v730, %v732
    %v734 = vrot.slane %v550, %v733
    %v736 = vunpack.c.l.s4 839922192
    %v737 = vunpack.c.0.s8 %v736
    %v738 = vlaneseq
    %v739 = vshrl.u32 %v738, 7
    %v740 = vsub.s32 %v737, %v739
    %v741 = vrot.slane %v557, %v740
    %v743 = vunpack.c.l.s4 1985246804
    %v744 = vunpack.c.0.s8 %v743
    %v745 = vlaneseq
    %v746 = vshrl.u32 %v745, 7
    %v747 = vsub.s32 %v744, %v746
    %v748 = vrot.slane %v557, %v747
    %v750 = vunpack.c.l.s4 839922192
    %v751 = vunpack.c.0.s8 %v750
    %v752 = vlaneseq
    %v753 = vshrl.u32 %v752, 7
    %v754 = vsub.s32 %v751, %v753
    %v755 = vrot.slane %v564, %v754
    %v757 = vunpack.c.l.s4 1985246804
    %v758 = vunpack.c.0.s8 %v757
    %v759 = vlaneseq
    %v760 = vshrl.u32 %v759, 7
    %v761 = vsub.s32 %v758, %v760
    %v762 = vrot.slane %v564, %v761
    %v764 = vunpack.c.l.s4 839922192
    %v765 = vunpack.c.0.s8 %v764
    %v766 = vlaneseq
    %v767 = vshrl.u32 %v766, 7
    %v768 = vsub.s32 %v765, %v767
    %v769 = vrot.slane %v571, %v768
    %v771 = vunpack.c.l.s4 1985246804
    %v772 = vunpack.c.0.s8 %v771
    %v773 = vlaneseq
    %v774 = vshrl.u32 %v773, 7
    %v775 = vsub.s32 %v772, %v774
    %v776 = vrot.slane %v571, %v775
    %v778 = vunpack.c.l.s4 839922192
    %v779 = vunpack.c.0.s8 %v778
    %v780 = vlaneseq
    %v781 = vshrl.u32 %v780, 7
    %v782 = vsub.s32 %v779, %v781
    %v783 = vrot.slane %v578, %v782
    %v785 = vunpack.c.l.s4 1985246804
    %v786 = vunpack.c.0.s8 %v785
    %v787 = vlaneseq
    %v788 = vshrl.u32 %v787, 7
    %v789 = vsub.s32 %v786, %v788
    %v790 = vrot.slane %v578, %v789
    %v792 = vunpack.c.l.s4 839922192
    %v793 = vunpack.c.0.s8 %v792
    %v794 = vlaneseq
    %v795 = vshrl.u32 %v794, 7
    %v796 = vsub.s32 %v793, %v795
    %v797 = vrot.slane %v585, %v796
    %v799 = vunpack.c.l.s4 1985246804
    %v800 = vunpack.c.0.s8 %v799
    %v801 = vlaneseq
    %v802 = vshrl.u32 %v801, 7
    %v803 = vsub.s32 %v800, %v802
    %v804 = vrot.slane %v585, %v803
    %v806 = vunpack.c.l.s4 839922192
    %v807 = vunpack.c.0.s8 %v806
    %v808 = vlaneseq
    %v809 = vshrl.u32 %v808, 7
    %v810 = vsub.s32 %v807, %v809
    %v811 = vrot.slane %v592, %v810
    %v813 = vunpack.c.l.s4 1985246804
    %v814 = vunpack.c.0.s8 %v813
    %v815 = vlaneseq
    %v816 = vshrl.u32 %v815, 7
    %v817 = vsub.s32 %v814, %v816
    %v818 = vrot.slane %v592, %v817
    %v820 = vunpack.c.l.s4 839922192
    %v821 = vunpack.c.0.s8 %v820
    %v822 = vlaneseq
    %v823 = vshrl.u32 %v822, 7
    %v824 = vsub.s32 %v821, %v823
    %v825 = vrot.slane %v599, %v824
    %v827 = vunpack.c.l.s4 1985246804
    %v828 = vunpack.c.0.s8 %v827
    %v829 = vlaneseq
    %v830 = vshrl.u32 %v829, 7
    %v831 = vsub.s32 %v828, %v830
    %v832 = vrot.slane %v599, %v831
    %v834 = vunpack.c.l.s4 839922192
    %v835 = vunpack.c.0.s8 %v834
    %v836 = vlaneseq
    %v837 = vshrl.u32 %v836, 7
    %v838 = vsub.s32 %v835, %v837
    %v839 = vrot.slane %v606, %v838
    %v841 = vunpack.c.l.s4 1985246804
    %v842 = vunpack.c.0.s8 %v841
    %v843 = vlaneseq
    %v844 = vshrl.u32 %v843, 7
    %v845 = vsub.s32 %v842, %v844
    %v846 = vrot.slane %v606, %v845
    %v879 = vsub.bf16 %v55, %v629
    %v880 = vsub.bf16 %v56, %v636
    %v881 = vsub.bf16 %v55, %v643
    %v882 = vsub.bf16 %v56, %v650
    %v883 = vsub.bf16 %v55, %v657
    %v884 = vsub.bf16 %v56, %v664
    %v885 = vsub.bf16 %v55, %v671
    %v886 = vsub.bf16 %v56, %v678
    %v887 = vsub.bf16 %v55, %v685
    %v888 = vsub.bf16 %v56, %v692
    %v889 = vsub.bf16 %v55, %v699
    %v890 = vsub.bf16 %v56, %v706
    %v891 = vsub.bf16 %v55, %v713
    %v892 = vsub.bf16 %v56, %v720
    %v893 = vsub.bf16 %v55, %v727
    %v894 = vsub.bf16 %v56, %v734
    %v895 = vsub.bf16 %v55, %v741
    %v896 = vsub.bf16 %v56, %v748
    %v897 = vsub.bf16 %v55, %v755
    %v898 = vsub.bf16 %v56, %v762
    %v899 = vsub.bf16 %v55, %v769
    %v900 = vsub.bf16 %v56, %v776
    %v901 = vsub.bf16 %v55, %v783
    %v902 = vsub.bf16 %v56, %v790
    %v903 = vsub.bf16 %v55, %v797
    %v904 = vsub.bf16 %v56, %v804
    %v905 = vsub.bf16 %v55, %v811
    %v906 = vsub.bf16 %v56, %v818
    %v907 = vsub.bf16 %v55, %v825
    %v908 = vsub.bf16 %v56, %v832
    %v909 = vsub.bf16 %v55, %v839
    %v910 = vsub.bf16 %v56, %v846
    %vm911 = vcmp.gt.bf16.partialorder %v879, 1056980736
    %vm912 = vcmp.gt.bf16.partialorder %v880, 1056980736
    %vm913 = vcmp.gt.bf16.partialorder %v881, 1056980736
    %vm914 = vcmp.gt.bf16.partialorder %v882, 1056980736
    %vm915 = vcmp.gt.bf16.partialorder %v883, 1056980736
    %vm916 = vcmp.gt.bf16.partialorder %v884, 1056980736
    %vm917 = vcmp.gt.bf16.partialorder %v885, 1056980736
    %vm918 = vcmp.gt.bf16.partialorder %v886, 1056980736
    %vm919 = vcmp.gt.bf16.partialorder %v887, 1056980736
    %vm920 = vcmp.gt.bf16.partialorder %v888, 1056980736
    %vm921 = vcmp.gt.bf16.partialorder %v889, 1056980736
    %vm922 = vcmp.gt.bf16.partialorder %v890, 1056980736
    %vm923 = vcmp.gt.bf16.partialorder %v891, 1056980736
    %vm924 = vcmp.gt.bf16.partialorder %v892, 1056980736
    %vm925 = vcmp.gt.bf16.partialorder %v893, 1056980736
    %vm926 = vcmp.gt.bf16.partialorder %v894, 1056980736
    %vm927 = vcmp.gt.bf16.partialorder %v895, 1056980736
    %vm928 = vcmp.gt.bf16.partialorder %v896, 1056980736
    %vm929 = vcmp.gt.bf16.partialorder %v897, 1056980736
    %vm930 = vcmp.gt.bf16.partialorder %v898, 1056980736
    %vm931 = vcmp.gt.bf16.partialorder %v899, 1056980736
    %vm932 = vcmp.gt.bf16.partialorder %v900, 1056980736
    %vm933 = vcmp.gt.bf16.partialorder %v901, 1056980736
    %vm934 = vcmp.gt.bf16.partialorder %v902, 1056980736
    %vm935 = vcmp.gt.bf16.partialorder %v903, 1056980736
    %vm936 = vcmp.gt.bf16.partialorder %v904, 1056980736
    %vm937 = vcmp.gt.bf16.partialorder %v905, 1056980736
    %vm938 = vcmp.gt.bf16.partialorder %v906, 1056980736
    %vm939 = vcmp.gt.bf16.partialorder %v907, 1056980736
    %vm940 = vcmp.gt.bf16.partialorder %v908, 1056980736
    %vm941 = vcmp.gt.bf16.partialorder %v909, 1056980736
    %vm942 = vcmp.gt.bf16.partialorder %v910, 1056980736
    %v943 = vsel %vm911, 0, %v452
    %v944 = vsel %vm912, 0, %v453
    %v945 = vsel %vm913, 0, %v454
    %v946 = vsel %vm914, 0, %v455
    %v947 = vsel %vm915, 0, %v456
    %v948 = vsel %vm916, 0, %v457
    %v949 = vsel %vm917, 0, %v458
    %v950 = vsel %vm918, 0, %v459
    %v951 = vsel %vm919, 0, %v460
    %v952 = vsel %vm920, 0, %v461
    %v953 = vsel %vm921, 0, %v462
    %v954 = vsel %vm922, 0, %v463
    %v955 = vsel %vm923, 0, %v464
    %v956 = vsel %vm924, 0, %v465
    %v957 = vsel %vm925, 0, %v466
    %v958 = vsel %vm926, 0, %v467
    %v959 = vsel %vm927, 0, %v468
    %v960 = vsel %vm928, 0, %v469
    %v961 = vsel %vm929, 0, %v470
    %v962 = vsel %vm930, 0, %v471
    %v963 = vsel %vm931, 0, %v472
    %v964 = vsel %vm932, 0, %v473
    %v965 = vsel %vm933, 0, %v474
    %v966 = vsel %vm934, 0, %v475
    %v967 = vsel %vm935, 0, %v476
    %v968 = vsel %vm936, 0, %v477
    %v969 = vsel %vm937, 0, %v478
    %v970 = vsel %vm938, 0, %v479
    %v971 = vsel %vm939, 0, %v480
    %v972 = vsel %vm940, 0, %v481
    %v973 = vsel %vm941, 0, %v482
    %v974 = vsel %vm942, 0, %v483
    %v975 = vtanh.bf16.pop %v943
    %v976 = vtanh.bf16.pop %v944
    %v977 = vtanh.bf16.pop %v945
    %v978 = vtanh.bf16.pop %v946
    %v979 = vtanh.bf16.pop %v947
    %v980 = vtanh.bf16.pop %v948
    %v981 = vtanh.bf16.pop %v949
    %v982 = vtanh.bf16.pop %v950
    %v983 = vtanh.bf16.pop %v951
    %v984 = vtanh.bf16.pop %v952
    %v985 = vtanh.bf16.pop %v953
    %v986 = vtanh.bf16.pop %v954
    %v987 = vtanh.bf16.pop %v955
    %v988 = vtanh.bf16.pop %v956
    %v989 = vtanh.bf16.pop %v957
    %v990 = vtanh.bf16.pop %v958
    %v991 = vtanh.bf16.pop %v959
    %v992 = vtanh.bf16.pop %v960
    %v993 = vtanh.bf16.pop %v961
    %v994 = vtanh.bf16.pop %v962
    %v995 = vtanh.bf16.pop %v963
    %v996 = vtanh.bf16.pop %v964
    %v997 = vtanh.bf16.pop %v965
    %v998 = vtanh.bf16.pop %v966
    %v999 = vtanh.bf16.pop %v967
    %v1000 = vtanh.bf16.pop %v968
    %v1001 = vtanh.bf16.pop %v969
    %v1002 = vtanh.bf16.pop %v970
    %v1003 = vtanh.bf16.pop %v971
    %v1004 = vtanh.bf16.pop %v972
    %v1005 = vtanh.bf16.pop %v973
    %v1006 = vtanh.bf16.pop %v974
    %v1010 = vunpack.c.l.s4 1966171168
    %v1011 = vunpack.c.0.s8 %v1010
    %v1012 = vlaneseq
    %v1013 = vshrl.u32 %v1012, 7
    %v1014 = vsub.s32 %v1011, %v1013
    %v1015 = vrot.slane %v47, %v1014
    %v1016 = vcombine.high %v1015, %v1015
    %v1018 = vunpack.c.l.s4 1966171168
    %v1019 = vunpack.c.0.s8 %v1018
    %v1020 = vlaneseq
    %v1021 = vshrl.u32 %v1020, 7
    %v1022 = vsub.s32 %v1019, %v1021
    %v1023 = vrot.slane %v1015, %v1022
    %v1025 = vunpack.c.l.s4 1966171168
    %v1026 = vunpack.c.0.s8 %v1025
    %v1027 = vlaneseq
    %v1028 = vshrl.u32 %v1027, 7
    %v1029 = vsub.s32 %v1026, %v1028
    %v1030 = vrot.slane %v1016, %v1029
    %v1031 = vcombine.high %v1023, %v1023
    %v1032 = vcombine.high %v1030, %v1030
    %v1034 = vunpack.c.l.s4 1966171168
    %v1035 = vunpack.c.0.s8 %v1034
    %v1036 = vlaneseq
    %v1037 = vshrl.u32 %v1036, 7
    %v1038 = vsub.s32 %v1035, %v1037
    %v1039 = vrot.slane %v48, %v1038
    %v1040 = vcombine.high %v1039, %v1039
    %v1042 = vunpack.c.l.s4 1966171168
    %v1043 = vunpack.c.0.s8 %v1042
    %v1044 = vlaneseq
    %v1045 = vshrl.u32 %v1044, 7
    %v1046 = vsub.s32 %v1043, %v1045
    %v1047 = vrot.slane %v1039, %v1046
    %v1049 = vunpack.c.l.s4 1966171168
    %v1050 = vunpack.c.0.s8 %v1049
    %v1051 = vlaneseq
    %v1052 = vshrl.u32 %v1051, 7
    %v1053 = vsub.s32 %v1050, %v1052
    %v1054 = vrot.slane %v1040, %v1053
    %v1055 = vcombine.high %v1047, %v1047
    %v1056 = vcombine.high %v1054, %v1054
    %v1057 = vunpack.i.l.s16 %v1023
    %v1058 = vunpack.i.h.s16 %v1023
    %v1059 = vunpack.i.l.s16 %v1030
    %v1060 = vunpack.i.h.s16 %v1030
    %v1061 = vunpack.i.l.s16 %v1031
    %v1062 = vunpack.i.h.s16 %v1031
    %v1063 = vunpack.i.l.s16 %v1032
    %v1064 = vunpack.i.h.s16 %v1032
    %v1065 = vunpack.i.l.s16 %v1047
    %v1066 = vunpack.i.h.s16 %v1047
    %v1067 = vunpack.i.l.s16 %v1054
    %v1068 = vunpack.i.h.s16 %v1054
    %v1069 = vunpack.i.l.s16 %v1055
    %v1070 = vunpack.i.h.s16 %v1055
    %v1071 = vunpack.i.l.s16 %v1056
    %v1072 = vunpack.i.h.s16 %v1056
    %v1073 = vpack.c.b16 %v1057, %v1057
    %v1074 = vpack.c.b16 %v1058, %v1058
    %v1075 = vpack.c.b16 %v1059, %v1059
    %v1076 = vpack.c.b16 %v1060, %v1060
    %v1077 = vpack.c.b16 %v1061, %v1061
    %v1078 = vpack.c.b16 %v1062, %v1062
    %v1079 = vpack.c.b16 %v1063, %v1063
    %v1080 = vpack.c.b16 %v1064, %v1064
    %v1081 = vpack.c.b16 %v1065, %v1065
    %v1082 = vpack.c.b16 %v1066, %v1066
    %v1083 = vpack.c.b16 %v1067, %v1067
    %v1084 = vpack.c.b16 %v1068, %v1068
    %v1085 = vpack.c.b16 %v1069, %v1069
    %v1086 = vpack.c.b16 %v1070, %v1070
    %v1087 = vpack.c.b16 %v1071, %v1071
    %v1088 = vpack.c.b16 %v1072, %v1072
    %vm1105 = vcmp.gt.bf16.partialorder %v1073, 0
    %vm1106 = vcmp.gt.bf16.partialorder %v1074, 0
    %vm1107 = vcmp.gt.bf16.partialorder %v1075, 0
    %vm1108 = vcmp.gt.bf16.partialorder %v1076, 0
    %vm1109 = vcmp.gt.bf16.partialorder %v1077, 0
    %vm1110 = vcmp.gt.bf16.partialorder %v1078, 0
    %vm1111 = vcmp.gt.bf16.partialorder %v1079, 0
    %vm1112 = vcmp.gt.bf16.partialorder %v1080, 0
    %vm1113 = vcmp.gt.bf16.partialorder %v1081, 0
    %vm1114 = vcmp.gt.bf16.partialorder %v1082, 0
    %vm1115 = vcmp.gt.bf16.partialorder %v1083, 0
    %vm1116 = vcmp.gt.bf16.partialorder %v1084, 0
    %vm1117 = vcmp.gt.bf16.partialorder %v1085, 0
    %vm1118 = vcmp.gt.bf16.partialorder %v1086, 0
    %vm1119 = vcmp.gt.bf16.partialorder %v1087, 0
    %vm1120 = vcmp.gt.bf16.partialorder %v1088, 0
    %v1121 = vsel %vm1105, 65537, 0
    %v1122 = vsel %vm1106, 65537, 0
    %v1123 = vsel %vm1107, 65537, 0
    %v1124 = vsel %vm1108, 65537, 0
    %v1125 = vsel %vm1109, 65537, 0
    %v1126 = vsel %vm1110, 65537, 0
    %v1127 = vsel %vm1111, 65537, 0
    %v1128 = vsel %vm1112, 65537, 0
    %v1129 = vsel %vm1113, 65537, 0
    %v1130 = vsel %vm1114, 65537, 0
    %v1131 = vsel %vm1115, 65537, 0
    %v1132 = vsel %vm1116, 65537, 0
    %v1133 = vsel %vm1117, 65537, 0
    %v1134 = vsel %vm1118, 65537, 0
    %v1135 = vsel %vm1119, 65537, 0
    %v1136 = vsel %vm1120, 65537, 0
    %v1137 = vunpack.c.l.b16 %v1121
    %v1138 = vunpack.c.l.b16 %v1122
    %v1139 = vunpack.c.l.b16 %v1123
    %v1140 = vunpack.c.l.b16 %v1124
    %v1141 = vunpack.c.l.b16 %v1125
    %v1142 = vunpack.c.l.b16 %v1126
    %v1143 = vunpack.c.l.b16 %v1127
    %v1144 = vunpack.c.l.b16 %v1128
    %v1145 = vunpack.c.l.b16 %v1129
    %v1146 = vunpack.c.l.b16 %v1130
    %v1147 = vunpack.c.l.b16 %v1131
    %v1148 = vunpack.c.l.b16 %v1132
    %v1149 = vunpack.c.l.b16 %v1133
    %v1150 = vunpack.c.l.b16 %v1134
    %v1151 = vunpack.c.l.b16 %v1135
    %v1152 = vunpack.c.l.b16 %v1136
    %v1153 = vpack.i.b16 %v1137, %v1137
    %v1154 = vpack.i.b16 %v1138, %v1138
    %v1155 = vpack.i.b16 %v1139, %v1139
    %v1156 = vpack.i.b16 %v1140, %v1140
    %v1157 = vpack.i.b16 %v1141, %v1141
    %v1158 = vpack.i.b16 %v1142, %v1142
    %v1159 = vpack.i.b16 %v1143, %v1143
    %v1160 = vpack.i.b16 %v1144, %v1144
    %v1161 = vpack.i.b16 %v1145, %v1145
    %v1162 = vpack.i.b16 %v1146, %v1146
    %v1163 = vpack.i.b16 %v1147, %v1147
    %v1164 = vpack.i.b16 %v1148, %v1148
    %v1165 = vpack.i.b16 %v1149, %v1149
    %v1166 = vpack.i.b16 %v1150, %v1150
    %v1167 = vpack.i.b16 %v1151, %v1151
    %v1168 = vpack.i.b16 %v1152, %v1152
    %vm1169 = vcmp.ne.s16.totalorder %v1153, 0
    %vm1170 = vcmp.ne.s16.totalorder %v1154, 0
    %vm1171 = vcmp.ne.s16.totalorder %v1155, 0
    %vm1172 = vcmp.ne.s16.totalorder %v1156, 0
    %vm1173 = vcmp.ne.s16.totalorder %v1157, 0
    %vm1174 = vcmp.ne.s16.totalorder %v1158, 0
    %vm1175 = vcmp.ne.s16.totalorder %v1159, 0
    %vm1176 = vcmp.ne.s16.totalorder %v1160, 0
    %vm1177 = vcmp.ne.s16.totalorder %v1161, 0
    %vm1178 = vcmp.ne.s16.totalorder %v1162, 0
    %vm1179 = vcmp.ne.s16.totalorder %v1163, 0
    %vm1180 = vcmp.ne.s16.totalorder %v1164, 0
    %vm1181 = vcmp.ne.s16.totalorder %v1165, 0
    %vm1182 = vcmp.ne.s16.totalorder %v1166, 0
    %vm1183 = vcmp.ne.s16.totalorder %v1167, 0
    %vm1184 = vcmp.ne.s16.totalorder %v1168, 0
    %v1185 = vsel %vm1169, 65537, 0
    %v1186 = vsel %vm1170, 65537, 0
    %v1187 = vsel %vm1171, 65537, 0
    %v1188 = vsel %vm1172, 65537, 0
    %v1189 = vsel %vm1173, 65537, 0
    %v1190 = vsel %vm1174, 65537, 0
    %v1191 = vsel %vm1175, 65537, 0
    %v1192 = vsel %vm1176, 65537, 0
    %v1193 = vsel %vm1177, 65537, 0
    %v1194 = vsel %vm1178, 65537, 0
    %v1195 = vsel %vm1179, 65537, 0
    %v1196 = vsel %vm1180, 65537, 0
    %v1197 = vsel %vm1181, 65537, 0
    %v1198 = vsel %vm1182, 65537, 0
    %v1199 = vsel %vm1183, 65537, 0
    %v1200 = vsel %vm1184, 65537, 0
    %v1201 = vunpack.c.l.b16 %v1185
    %v1202 = vunpack.c.l.b16 %v1186
    %v1203 = vunpack.c.l.b16 %v1187
    %v1204 = vunpack.c.l.b16 %v1188
    %v1205 = vunpack.c.l.b16 %v1189
    %v1206 = vunpack.c.l.b16 %v1190
    %v1207 = vunpack.c.l.b16 %v1191
    %v1208 = vunpack.c.l.b16 %v1192
    %v1209 = vunpack.c.l.b16 %v1193
    %v1210 = vunpack.c.l.b16 %v1194
    %v1211 = vunpack.c.l.b16 %v1195
    %v1212 = vunpack.c.l.b16 %v1196
    %v1213 = vunpack.c.l.b16 %v1197
    %v1214 = vunpack.c.l.b16 %v1198
    %v1215 = vunpack.c.l.b16 %v1199
    %v1216 = vunpack.c.l.b16 %v1200
    %vm1217 = vcmp.ne.s32.totalorder %v1201, 0
    %vm1218 = vcmp.ne.s32.totalorder %v1202, 0
    %vm1219 = vcmp.ne.s32.totalorder %v1203, 0
    %vm1220 = vcmp.ne.s32.totalorder %v1204, 0
    %vm1221 = vcmp.ne.s32.totalorder %v1205, 0
    %vm1222 = vcmp.ne.s32.totalorder %v1206, 0
    %vm1223 = vcmp.ne.s32.totalorder %v1207, 0
    %vm1224 = vcmp.ne.s32.totalorder %v1208, 0
    %vm1225 = vcmp.ne.s32.totalorder %v1209, 0
    %vm1226 = vcmp.ne.s32.totalorder %v1210, 0
    %vm1227 = vcmp.ne.s32.totalorder %v1211, 0
    %vm1228 = vcmp.ne.s32.totalorder %v1212, 0
    %vm1229 = vcmp.ne.s32.totalorder %v1213, 0
    %vm1230 = vcmp.ne.s32.totalorder %v1214, 0
    %vm1231 = vcmp.ne.s32.totalorder %v1215, 0
    %vm1232 = vcmp.ne.s32.totalorder %v1216, 0
    %v1233 = vsel %vm1217, 1, 0
    %v1234 = vsel %vm1218, 1, 0
    %v1235 = vsel %vm1219, 1, 0
    %v1236 = vsel %vm1220, 1, 0
    %v1237 = vsel %vm1221, 1, 0
    %v1238 = vsel %vm1222, 1, 0
    %v1239 = vsel %vm1223, 1, 0
    %v1240 = vsel %vm1224, 1, 0
    %v1241 = vsel %vm1225, 1, 0
    %v1242 = vsel %vm1226, 1, 0
    %v1243 = vsel %vm1227, 1, 0
    %v1244 = vsel %vm1228, 1, 0
    %v1245 = vsel %vm1229, 1, 0
    %v1246 = vsel %vm1230, 1, 0
    %v1247 = vsel %vm1231, 1, 0
    %v1248 = vsel %vm1232, 1, 0
    %v1249 = vlaneseq
    %v1250 = vshrl.u32 %v1249, 7
    %v1251 = vsub.s32 0, %v1250
    %v1252 = vrot.slane %v1233, %v1251
    %v1253 = vlaneseq
    %v1254 = vshrl.u32 %v1253, 7
    %v1255 = vsub.s32 0, %v1254
    %v1256 = vrot.slane %v1234, %v1255
    %v1257 = vlaneseq
    %v1258 = vshrl.u32 %v1257, 7
    %v1259 = vsub.s32 0, %v1258
    %v1260 = vrot.slane %v1235, %v1259
    %v1261 = vlaneseq
    %v1262 = vshrl.u32 %v1261, 7
    %v1263 = vsub.s32 0, %v1262
    %v1264 = vrot.slane %v1236, %v1263
    %v1265 = vlaneseq
    %v1266 = vshrl.u32 %v1265, 7
    %v1267 = vsub.s32 0, %v1266
    %v1268 = vrot.slane %v1237, %v1267
    %v1269 = vlaneseq
    %v1270 = vshrl.u32 %v1269, 7
    %v1271 = vsub.s32 0, %v1270
    %v1272 = vrot.slane %v1238, %v1271
    %v1273 = vlaneseq
    %v1274 = vshrl.u32 %v1273, 7
    %v1275 = vsub.s32 0, %v1274
    %v1276 = vrot.slane %v1239, %v1275
    %v1277 = vlaneseq
    %v1278 = vshrl.u32 %v1277, 7
    %v1279 = vsub.s32 0, %v1278
    %v1280 = vrot.slane %v1240, %v1279
    %v1281 = vlaneseq
    %v1282 = vshrl.u32 %v1281, 7
    %v1283 = vsub.s32 0, %v1282
    %v1284 = vrot.slane %v1241, %v1283
    %v1285 = vlaneseq
    %v1286 = vshrl.u32 %v1285, 7
    %v1287 = vsub.s32 0, %v1286
    %v1288 = vrot.slane %v1242, %v1287
    %v1289 = vlaneseq
    %v1290 = vshrl.u32 %v1289, 7
    %v1291 = vsub.s32 0, %v1290
    %v1292 = vrot.slane %v1243, %v1291
    %v1293 = vlaneseq
    %v1294 = vshrl.u32 %v1293, 7
    %v1295 = vsub.s32 0, %v1294
    %v1296 = vrot.slane %v1244, %v1295
    %v1297 = vlaneseq
    %v1298 = vshrl.u32 %v1297, 7
    %v1299 = vsub.s32 0, %v1298
    %v1300 = vrot.slane %v1245, %v1299
    %v1301 = vlaneseq
    %v1302 = vshrl.u32 %v1301, 7
    %v1303 = vsub.s32 0, %v1302
    %v1304 = vrot.slane %v1246, %v1303
    %v1305 = vlaneseq
    %v1306 = vshrl.u32 %v1305, 7
    %v1307 = vsub.s32 0, %v1306
    %v1308 = vrot.slane %v1247, %v1307
    %v1309 = vlaneseq
    %v1310 = vshrl.u32 %v1309, 7
    %v1311 = vsub.s32 0, %v1310
    %v1312 = vrot.slane %v1248, %v1311
    %vm1313 = vcmp.eq.s32.totalorder %v1252, 1
    %vm1314 = vcmp.eq.s32.totalorder %v1256, 1
    %vm1315 = vcmp.eq.s32.totalorder %v1260, 1
    %vm1316 = vcmp.eq.s32.totalorder %v1264, 1
    %vm1317 = vcmp.eq.s32.totalorder %v1268, 1
    %vm1318 = vcmp.eq.s32.totalorder %v1272, 1
    %vm1319 = vcmp.eq.s32.totalorder %v1276, 1
    %vm1320 = vcmp.eq.s32.totalorder %v1280, 1
    %vm1321 = vcmp.eq.s32.totalorder %v1284, 1
    %vm1322 = vcmp.eq.s32.totalorder %v1288, 1
    %vm1323 = vcmp.eq.s32.totalorder %v1292, 1
    %vm1324 = vcmp.eq.s32.totalorder %v1296, 1
    %vm1325 = vcmp.eq.s32.totalorder %v1300, 1
    %vm1326 = vcmp.eq.s32.totalorder %v1304, 1
    %vm1327 = vcmp.eq.s32.totalorder %v1308, 1
    %vm1328 = vcmp.eq.s32.totalorder %v1312, 1
    %vm1329 = vmpackc.low %vm1313, %vm1313
    %vm1330 = vmpackc.low %vm1314, %vm1314
    %vm1331 = vmpackc.low %vm1315, %vm1315
    %vm1332 = vmpackc.low %vm1316, %vm1316
    %vm1333 = vmpackc.low %vm1317, %vm1317
    %vm1334 = vmpackc.low %vm1318, %vm1318
    %vm1335 = vmpackc.low %vm1319, %vm1319
    %vm1336 = vmpackc.low %vm1320, %vm1320
    %vm1337 = vmpackc.low %vm1321, %vm1321
    %vm1338 = vmpackc.low %vm1322, %vm1322
    %vm1339 = vmpackc.low %vm1323, %vm1323
    %vm1340 = vmpackc.low %vm1324, %vm1324
    %vm1341 = vmpackc.low %vm1325, %vm1325
    %vm1342 = vmpackc.low %vm1326, %vm1326
    %vm1343 = vmpackc.low %vm1327, %vm1327
    %vm1344 = vmpackc.low %vm1328, %vm1328
    %v1345 = vsel %vm1329, %v975, 0
    %v1346 = vsel %vm1329, %v976, 0
    %v1347 = vsel %vm1330, %v977, 0
    %v1348 = vsel %vm1330, %v978, 0
    %v1349 = vsel %vm1331, %v979, 0
    %v1350 = vsel %vm1331, %v980, 0
    %v1351 = vsel %vm1332, %v981, 0
    %v1352 = vsel %vm1332, %v982, 0
    %v1353 = vsel %vm1333, %v983, 0
    %v1354 = vsel %vm1333, %v984, 0
    %v1355 = vsel %vm1334, %v985, 0
    %v1356 = vsel %vm1334, %v986, 0
    %v1357 = vsel %vm1335, %v987, 0
    %v1358 = vsel %vm1335, %v988, 0
    %v1359 = vsel %vm1336, %v989, 0
    %v1360 = vsel %vm1336, %v990, 0
    %v1361 = vsel %vm1337, %v991, 0
    %v1362 = vsel %vm1337, %v992, 0
    %v1363 = vsel %vm1338, %v993, 0
    %v1364 = vsel %vm1338, %v994, 0
    %v1365 = vsel %vm1339, %v995, 0
    %v1366 = vsel %vm1339, %v996, 0
    %v1367 = vsel %vm1340, %v997, 0
    %v1368 = vsel %vm1340, %v998, 0
    %v1369 = vsel %vm1341, %v999, 0
    %v1370 = vsel %vm1341, %v1000, 0
    %v1371 = vsel %vm1342, %v1001, 0
    %v1372 = vsel %vm1342, %v1002, 0
    %v1373 = vsel %vm1343, %v1003, 0
    %v1374 = vsel %vm1343, %v1004, 0
    %v1375 = vsel %vm1344, %v1005, 0
    %v1376 = vsel %vm1344, %v1006, 0
    %v1377 = vld [vmem:[#allocation2] sm:$0xff]
    %v1378 = vld [vmem:[#allocation2 + $0x8] sm:$0xff]
    %v1379 = vunpack.c.l.bf16 %v1345
    %v1380 = vunpack.c.l.bf16 %v1346
    %v1381 = vunpack.c.l.bf16 %v1347
    %v1382 = vunpack.c.l.bf16 %v1348
    %v1383 = vunpack.c.l.bf16 %v1349
    %v1384 = vunpack.c.l.bf16 %v1350
    %v1385 = vunpack.c.l.bf16 %v1351
    %v1386 = vunpack.c.l.bf16 %v1352
    %v1387 = vunpack.c.l.bf16 %v1353
    %v1388 = vunpack.c.l.bf16 %v1354
    %v1389 = vunpack.c.l.bf16 %v1355
    %v1390 = vunpack.c.l.bf16 %v1356
    %v1391 = vunpack.c.l.bf16 %v1357
    %v1392 = vunpack.c.l.bf16 %v1358
    %v1393 = vunpack.c.l.bf16 %v1359
    %v1394 = vunpack.c.l.bf16 %v1360
    %v1395 = vunpack.c.l.bf16 %v1361
    %v1396 = vunpack.c.l.bf16 %v1362
    %v1397 = vunpack.c.l.bf16 %v1363
    %v1398 = vunpack.c.l.bf16 %v1364
    %v1399 = vunpack.c.l.bf16 %v1365
    %v1400 = vunpack.c.l.bf16 %v1366
    %v1401 = vunpack.c.l.bf16 %v1367
    %v1402 = vunpack.c.l.bf16 %v1368
    %v1403 = vunpack.c.l.bf16 %v1369
    %v1404 = vunpack.c.l.bf16 %v1370
    %v1405 = vunpack.c.l.bf16 %v1371
    %v1406 = vunpack.c.l.bf16 %v1372
    %v1407 = vunpack.c.l.bf16 %v1373
    %v1408 = vunpack.c.l.bf16 %v1374
    %v1409 = vunpack.c.l.bf16 %v1375
    %v1410 = vunpack.c.l.bf16 %v1376
    %1411 = vadd.xlane.f32.xlu0 %v1379
    %v1412 = vpop.xlane.xlu0 %1411
    %1413 = vadd.xlane.f32.xlu0 %v1380
    %v1414 = vpop.xlane.xlu0 %1413
    %1415 = vadd.xlane.f32.xlu0 %v1381
    %v1416 = vpop.xlane.xlu0 %1415
    %1417 = vadd.xlane.f32.xlu0 %v1382
    %v1418 = vpop.xlane.xlu0 %1417
    %1419 = vadd.xlane.f32.xlu0 %v1383
    %v1420 = vpop.xlane.xlu0 %1419
    %1421 = vadd.xlane.f32.xlu0 %v1384
    %v1422 = vpop.xlane.xlu0 %1421
    %1423 = vadd.xlane.f32.xlu0 %v1385
    %v1424 = vpop.xlane.xlu0 %1423
    %1425 = vadd.xlane.f32.xlu0 %v1386
    %v1426 = vpop.xlane.xlu0 %1425
    %1427 = vadd.xlane.f32.xlu0 %v1387
    %v1428 = vpop.xlane.xlu0 %1427
    %1429 = vadd.xlane.f32.xlu0 %v1388
    %v1430 = vpop.xlane.xlu0 %1429
    %1431 = vadd.xlane.f32.xlu0 %v1389
    %v1432 = vpop.xlane.xlu0 %1431
    %1433 = vadd.xlane.f32.xlu0 %v1390
    %v1434 = vpop.xlane.xlu0 %1433
    %1435 = vadd.xlane.f32.xlu0 %v1391
    %v1436 = vpop.xlane.xlu0 %1435
    %1437 = vadd.xlane.f32.xlu0 %v1392
    %v1438 = vpop.xlane.xlu0 %1437
    %1439 = vadd.xlane.f32.xlu0 %v1393
    %v1440 = vpop.xlane.xlu0 %1439
    %1441 = vadd.xlane.f32.xlu0 %v1394
    %v1442 = vpop.xlane.xlu0 %1441
    %1443 = vadd.xlane.f32.xlu0 %v1395
    %v1444 = vpop.xlane.xlu0 %1443
    %1445 = vadd.xlane.f32.xlu0 %v1396
    %v1446 = vpop.xlane.xlu0 %1445
    %1447 = vadd.xlane.f32.xlu0 %v1397
    %v1448 = vpop.xlane.xlu0 %1447
    %1449 = vadd.xlane.f32.xlu0 %v1398
    %v1450 = vpop.xlane.xlu0 %1449
    %1451 = vadd.xlane.f32.xlu0 %v1399
    %v1452 = vpop.xlane.xlu0 %1451
    %1453 = vadd.xlane.f32.xlu0 %v1400
    %v1454 = vpop.xlane.xlu0 %1453
    %1455 = vadd.xlane.f32.xlu0 %v1401
    %v1456 = vpop.xlane.xlu0 %1455
    %1457 = vadd.xlane.f32.xlu0 %v1402
    %v1458 = vpop.xlane.xlu0 %1457
    %1459 = vadd.xlane.f32.xlu0 %v1403
    %v1460 = vpop.xlane.xlu0 %1459
    %1461 = vadd.xlane.f32.xlu0 %v1404
    %v1462 = vpop.xlane.xlu0 %1461
    %1463 = vadd.xlane.f32.xlu0 %v1405
    %v1464 = vpop.xlane.xlu0 %1463
    %1465 = vadd.xlane.f32.xlu0 %v1406
    %v1466 = vpop.xlane.xlu0 %1465
    %1467 = vadd.xlane.f32.xlu0 %v1407
    %v1468 = vpop.xlane.xlu0 %1467
    %1469 = vadd.xlane.f32.xlu0 %v1408
    %v1470 = vpop.xlane.xlu0 %1469
    %1471 = vadd.xlane.f32.xlu0 %v1409
    %v1472 = vpop.xlane.xlu0 %1471
    %1473 = vadd.xlane.f32.xlu0 %v1410
    %v1474 = vpop.xlane.xlu0 %1473
    %v1507 = vlaneseq
    %v1508 = vand.u32 %v1507, 127
    %v1509 = vlaneseq
    %v1510 = vshrl.u32 %v1509, 7
    %v1511 = vsub.s32 %v1508, %v1510
    %v1512 = vrot.slane %v1412, %v1511
    %v1513 = vadd.s32 %v1508, 4294967288
    %v1514 = vlaneseq
    %v1515 = vshrl.u32 %v1514, 7
    %v1516 = vsub.s32 %v1513, %v1515
    %v1517 = vrot.slane %v1414, %v1516
    %vm1518 = vcmask 130112
    %v1519 = vsel %vm1518, %v1517, %v1512
    %v1520 = vlaneseq
    %v1521 = vshrl.u32 %v1520, 7
    %v1522 = vsub.s32 %v1508, %v1521
    %v1523 = vrot.slane %v1416, %v1522
    %v1524 = vlaneseq
    %v1525 = vshrl.u32 %v1524, 7
    %v1526 = vsub.s32 %v1513, %v1525
    %v1527 = vrot.slane %v1418, %v1526
    %v1528 = vsel %vm1518, %v1527, %v1523
    %v1529 = vlaneseq
    %v1530 = vshrl.u32 %v1529, 7
    %v1531 = vsub.s32 %v1508, %v1530
    %v1532 = vrot.slane %v1420, %v1531
    %v1533 = vlaneseq
    %v1534 = vshrl.u32 %v1533, 7
    %v1535 = vsub.s32 %v1513, %v1534
    %v1536 = vrot.slane %v1422, %v1535
    %v1537 = vsel %vm1518, %v1536, %v1532
    %v1538 = vlaneseq
    %v1539 = vshrl.u32 %v1538, 7
    %v1540 = vsub.s32 %v1508, %v1539
    %v1541 = vrot.slane %v1424, %v1540
    %v1542 = vlaneseq
    %v1543 = vshrl.u32 %v1542, 7
    %v1544 = vsub.s32 %v1513, %v1543
    %v1545 = vrot.slane %v1426, %v1544
    %v1546 = vsel %vm1518, %v1545, %v1541
    %v1547 = vlaneseq
    %v1548 = vshrl.u32 %v1547, 7
    %v1549 = vsub.s32 %v1508, %v1548
    %v1550 = vrot.slane %v1428, %v1549
    %v1551 = vlaneseq
    %v1552 = vshrl.u32 %v1551, 7
    %v1553 = vsub.s32 %v1513, %v1552
    %v1554 = vrot.slane %v1430, %v1553
    %v1555 = vsel %vm1518, %v1554, %v1550
    %v1556 = vlaneseq
    %v1557 = vshrl.u32 %v1556, 7
    %v1558 = vsub.s32 %v1508, %v1557
    %v1559 = vrot.slane %v1432, %v1558
    %v1560 = vlaneseq
    %v1561 = vshrl.u32 %v1560, 7
    %v1562 = vsub.s32 %v1513, %v1561
    %v1563 = vrot.slane %v1434, %v1562
    %v1564 = vsel %vm1518, %v1563, %v1559
    %v1565 = vlaneseq
    %v1566 = vshrl.u32 %v1565, 7
    %v1567 = vsub.s32 %v1508, %v1566
    %v1568 = vrot.slane %v1436, %v1567
    %v1569 = vlaneseq
    %v1570 = vshrl.u32 %v1569, 7
    %v1571 = vsub.s32 %v1513, %v1570
    %v1572 = vrot.slane %v1438, %v1571
    %v1573 = vsel %vm1518, %v1572, %v1568
    %v1574 = vlaneseq
    %v1575 = vshrl.u32 %v1574, 7
    %v1576 = vsub.s32 %v1508, %v1575
    %v1577 = vrot.slane %v1440, %v1576
    %v1578 = vlaneseq
    %v1579 = vshrl.u32 %v1578, 7
    %v1580 = vsub.s32 %v1513, %v1579
    %v1581 = vrot.slane %v1442, %v1580
    %v1582 = vsel %vm1518, %v1581, %v1577
    %v1583 = vlaneseq
    %v1584 = vshrl.u32 %v1583, 7
    %v1585 = vsub.s32 %v1508, %v1584
    %v1586 = vrot.slane %v1444, %v1585
    %v1587 = vlaneseq
    %v1588 = vshrl.u32 %v1587, 7
    %v1589 = vsub.s32 %v1513, %v1588
    %v1590 = vrot.slane %v1446, %v1589
    %v1591 = vsel %vm1518, %v1590, %v1586
    %v1592 = vlaneseq
    %v1593 = vshrl.u32 %v1592, 7
    %v1594 = vsub.s32 %v1508, %v1593
    %v1595 = vrot.slane %v1448, %v1594
    %v1596 = vlaneseq
    %v1597 = vshrl.u32 %v1596, 7
    %v1598 = vsub.s32 %v1513, %v1597
    %v1599 = vrot.slane %v1450, %v1598
    %v1600 = vsel %vm1518, %v1599, %v1595
    %v1601 = vlaneseq
    %v1602 = vshrl.u32 %v1601, 7
    %v1603 = vsub.s32 %v1508, %v1602
    %v1604 = vrot.slane %v1452, %v1603
    %v1605 = vlaneseq
    %v1606 = vshrl.u32 %v1605, 7
    %v1607 = vsub.s32 %v1513, %v1606
    %v1608 = vrot.slane %v1454, %v1607
    %v1609 = vsel %vm1518, %v1608, %v1604
    %v1610 = vlaneseq
    %v1611 = vshrl.u32 %v1610, 7
    %v1612 = vsub.s32 %v1508, %v1611
    %v1613 = vrot.slane %v1456, %v1612
    %v1614 = vlaneseq
    %v1615 = vshrl.u32 %v1614, 7
    %v1616 = vsub.s32 %v1513, %v1615
    %v1617 = vrot.slane %v1458, %v1616
    %v1618 = vsel %vm1518, %v1617, %v1613
    %v1619 = vlaneseq
    %v1620 = vshrl.u32 %v1619, 7
    %v1621 = vsub.s32 %v1508, %v1620
    %v1622 = vrot.slane %v1460, %v1621
    %v1623 = vlaneseq
    %v1624 = vshrl.u32 %v1623, 7
    %v1625 = vsub.s32 %v1513, %v1624
    %v1626 = vrot.slane %v1462, %v1625
    %v1627 = vsel %vm1518, %v1626, %v1622
    %v1628 = vlaneseq
    %v1629 = vshrl.u32 %v1628, 7
    %v1630 = vsub.s32 %v1508, %v1629
    %v1631 = vrot.slane %v1464, %v1630
    %v1632 = vlaneseq
    %v1633 = vshrl.u32 %v1632, 7
    %v1634 = vsub.s32 %v1513, %v1633
    %v1635 = vrot.slane %v1466, %v1634
    %v1636 = vsel %vm1518, %v1635, %v1631
    %v1637 = vlaneseq
    %v1638 = vshrl.u32 %v1637, 7
    %v1639 = vsub.s32 %v1508, %v1638
    %v1640 = vrot.slane %v1468, %v1639
    %v1641 = vlaneseq
    %v1642 = vshrl.u32 %v1641, 7
    %v1643 = vsub.s32 %v1513, %v1642
    %v1644 = vrot.slane %v1470, %v1643
    %v1645 = vsel %vm1518, %v1644, %v1640
    %v1646 = vlaneseq
    %v1647 = vshrl.u32 %v1646, 7
    %v1648 = vsub.s32 %v1508, %v1647
    %v1649 = vrot.slane %v1472, %v1648
    %v1650 = vlaneseq
    %v1651 = vshrl.u32 %v1650, 7
    %v1652 = vsub.s32 %v1513, %v1651
    %v1653 = vrot.slane %v1474, %v1652
    %v1654 = vsel %vm1518, %v1653, %v1649
    %vm1655 = vcmask 1041409
    %v1656 = vsel %vm1655, %v1528, %v1519
    %vm1657 = vcmask 1042434
    %v1658 = vsel %vm1657, %v1537, %v1656
    %vm1659 = vcmask 1043459
    %v1660 = vsel %vm1659, %v1546, %v1658
    %vm1661 = vcmask 1044484
    %v1662 = vsel %vm1661, %v1555, %v1660
    %vm1663 = vcmask 1045509
    %v1664 = vsel %vm1663, %v1564, %v1662
    %vm1665 = vcmask 1046534
    %v1666 = vsel %vm1665, %v1573, %v1664
    %vm1667 = vcmask 1047559
    %v1668 = vsel %vm1667, %v1582, %v1666
    %v1669 = vsel %vm1655, %v1600, %v1591
    %v1670 = vsel %vm1657, %v1609, %v1669
    %v1671 = vsel %vm1659, %v1618, %v1670
    %v1672 = vsel %vm1661, %v1627, %v1671
    %v1673 = vsel %vm1663, %v1636, %v1672
    %v1674 = vsel %vm1665, %v1645, %v1673
    %v1675 = vsel %vm1667, %v1654, %v1674
    %v1678 = vadd.f32 %v1377, %v1668
    %v1679 = vadd.f32 %v1378, %v1675
    %vm1680 = vcmask 130048
    %1681 = vst.msk [vmem:[#allocation2] sm:$0xff] %vm1680, %v1678
    %1682 = vst.msk [vmem:[#allocation2 + $0x8] sm:$0xff] %vm1680, %v1679
    %v1683 = vld [vmem:[#allocation3] sm:$0xff]
    %v1684 = vld [vmem:[#allocation3 + $0x8] sm:$0xff]
    %v1685 = vld [vmem:[%s6] sm:$0xf]
    %v1686 = vld [vmem:[%s6 + $0x4] sm:$0xf]
    %v1687 = vld [vmem:[%s6 + $0x8] sm:$0xf]
    %v1688 = vld [vmem:[%s6 + $0xc] sm:$0xf]
    %v1689 = vld [vmem:[%s6 + $0x10] sm:$0xf]
    %v1690 = vld [vmem:[%s6 + $0x14] sm:$0xf]
    %v1691 = vld [vmem:[%s6 + $0x18] sm:$0xf]
    %v1692 = vld [vmem:[%s6 + $0x1c] sm:$0xf]
    %v1693 = vld [vmem:[%s6 + $0x20] sm:$0xf]
    %v1694 = vld [vmem:[%s6 + $0x24] sm:$0xf]
    %v1695 = vld [vmem:[%s6 + $0x28] sm:$0xf]
    %v1696 = vld [vmem:[%s6 + $0x2c] sm:$0xf]
    %v1697 = vld [vmem:[%s6 + $0x30] sm:$0xf]
    %v1698 = vld [vmem:[%s6 + $0x34] sm:$0xf]
    %v1699 = vld [vmem:[%s6 + $0x38] sm:$0xf]
    %v1700 = vld [vmem:[%s6 + $0x3c] sm:$0xf]
    %v1701 = vunpack.c.l.b16 %v47
    %v1702 = vunpack.c.l.b16 %v48
    %v1703 = vpack.c.b16 %v1702, %v1701
    %v1721 = vunpack.c.l.b16 %v1685
    %v1722 = vunpack.c.l.b16 %v1686
    %v1723 = vunpack.c.l.b16 %v1687
    %v1724 = vunpack.c.l.b16 %v1688
    %v1725 = vunpack.c.l.b16 %v1689
    %v1726 = vunpack.c.l.b16 %v1690
    %v1727 = vunpack.c.l.b16 %v1691
    %v1728 = vunpack.c.l.b16 %v1692
    %v1729 = vunpack.c.l.b16 %v1693
    %v1730 = vunpack.c.l.b16 %v1694
    %v1731 = vunpack.c.l.b16 %v1695
    %v1732 = vunpack.c.l.b16 %v1696
    %v1733 = vunpack.c.l.b16 %v1697
    %v1734 = vunpack.c.l.b16 %v1698
    %v1735 = vunpack.c.l.b16 %v1699
    %v1736 = vunpack.c.l.b16 %v1700
    %v1737 = vpack.c.b16 %v1722, %v1721
    %v1738 = vpack.c.b16 %v1724, %v1723
    %v1739 = vpack.c.b16 %v1726, %v1725
    %v1740 = vpack.c.b16 %v1728, %v1727
    %v1741 = vpack.c.b16 %v1730, %v1729
    %v1742 = vpack.c.b16 %v1732, %v1731
    %v1743 = vpack.c.b16 %v1734, %v1733
    %v1744 = vpack.c.b16 %v1736, %v1735
    %1753 = vmatprep.subr.bf16.mxu0 0
    %1754 = vmatpush1.bf16.msra.mxu0 %v1737
    %1755 = vmatprep.subr.bf16.mxu0 0
    %1756 = vmatpush1.bf16.msra.mxu0 %v1738
    %1757 = vmatprep.subr.bf16.mxu0 0
    %1758 = vmatpush1.bf16.msra.mxu0 %v1739
    %1759 = vmatprep.subr.bf16.mxu0 0
    %1760 = vmatpush1.bf16.msra.mxu0 %v1740
    %1761 = vmatprep.subr.bf16.mxu0 0
    %1762 = vmatpush1.bf16.msra.mxu0 %v1741
    %1763 = vmatprep.subr.bf16.mxu0 0
    %1764 = vmatpush1.bf16.msra.mxu0 %v1742
    %1765 = vmatprep.subr.bf16.mxu0 0
    %1766 = vmatpush1.bf16.msra.mxu0 %v1743
    %1767 = vmatprep.subr.bf16.mxu0 0
    %1768 = vmatpush1.bf16.msra.mxu0 %v1744
    %1769 = vmatprep.subr.bf16.mxu0 0
    %1770 = vmatpush1.bf16.msra.mxu0 0
    %1771 = vmatprep.subr.bf16.mxu0 0
    %1772 = vmatpush1.bf16.msra.mxu0 0
    %1773 = vmatprep.subr.bf16.mxu0 0
    %1774 = vmatpush1.bf16.msra.mxu0 0
    %1775 = vmatprep.subr.bf16.mxu0 0
    %1776 = vmatpush1.bf16.msra.mxu0 0
    %1777 = vmatprep.subr.bf16.mxu0 0
    %1778 = vmatpush1.bf16.msra.mxu0 0
    %1779 = vmatprep.subr.bf16.mxu0 0
    %1780 = vmatpush1.bf16.msra.mxu0 0
    %1781 = vmatprep.subr.bf16.mxu0 0
    %1782 = vmatpush1.bf16.msra.mxu0 0
    %1783 = vmatprep.subr.bf16.mxu0 0
    %1784 = vmatpush1.bf16.msra.mxu0 0
    %1785 = vmatprep.mubr.bf16.mxu0 0
    %1786 = vmatmul.mubr.bf16.gmra.mrb[0].mxu0 %v1703
    %v1787 = vpop.f32.mrb[0].mxu0
    %v1788 = vadd.f32 0.0, %v1787
    %v1789 = vpop.f32.mrb[0].mxu0
    %v1790 = vpop.f32.mrb[0].mxu0
    %v1791 = vadd.f32 0.0, %v1790
    %v1792 = vpop.f32.mrb[0].mxu0
    %1793 = vdwg.mxu0
    %v1794 = vadd.f32 %v1683, %v1788
    %v1795 = vadd.f32 %v1684, %v1791
    %vm1796 = vcmask 261120
    %1797 = vst.msk [vmem:[#allocation3] sm:$0xff] %vm1796, %v1794
    %1798 = vst.msk [vmem:[#allocation3 + $0x8] sm:$0xff] %vm1796, %v1795
    // Predicated region
    $region42: #{tpu_custom_call.1} parent=1 // pred_check
      %p1799 = pneg %p37
    $region43: #{tpu_custom_call.1} parent=1 // pred_check_branch
      %1801 = sbr.rel (%p1799) target = $region45
    $region44: #{tpu_custom_call.1} parent=1 // pred_region
      %v1802 = vld [vmem:[#allocation2] sm:$0xff]
      %v1803 = vld [vmem:[#allocation2 + $0x8] sm:$0xff]
      %v1804 = vpack.c.bf16 %v1803, %v1802
      %v1805 = vld [vmem:[%s7] sm:$0xff]
      %v1806 = vld [vmem:[%s7 + $0x8] sm:$0xff]
      %v1807 = vpack.c.bf16 %v1806, %v1805
      %v1808 = vld [vmem:[#allocation3] sm:$0xff]
      %v1809 = vld [vmem:[#allocation3 + $0x8] sm:$0xff]
      %v1811 = vsel %vm1680, %v1804, 0
      %1813 = vmatprep.subr.bf16.mxu0 0
      %1814 = vmatpush1.bf16.msra.mxu0 %v1807
      %1815 = vmatprep.subr.bf16.mxu0 0
      %1816 = vmatpush1.bf16.msra.mxu0 0
      %1817 = vmatprep.subr.bf16.mxu0 0
      %1818 = vmatpush1.bf16.msra.mxu0 0
      %1819 = vmatprep.subr.bf16.mxu0 0
      %1820 = vmatpush1.bf16.msra.mxu0 0
      %1821 = vmatprep.subr.bf16.mxu0 0
      %1822 = vmatpush1.bf16.msra.mxu0 0
      %1823 = vmatprep.subr.bf16.mxu0 0
      %1824 = vmatpush1.bf16.msra.mxu0 0
      %1825 = vmatprep.subr.bf16.mxu0 0
      %1826 = vmatpush1.bf16.msra.mxu0 0
      %1827 = vmatprep.subr.bf16.mxu0 0
      %1828 = vmatpush1.bf16.msra.mxu0 0
      %1829 = vmatprep.subr.bf16.mxu0 0
      %1830 = vmatpush1.bf16.msra.mxu0 0
      %1831 = vmatprep.subr.bf16.mxu0 0
      %1832 = vmatpush1.bf16.msra.mxu0 0
      %1833 = vmatprep.subr.bf16.mxu0 0
      %1834 = vmatpush1.bf16.msra.mxu0 0
      %1835 = vmatprep.subr.bf16.mxu0 0
      %1836 = vmatpush1.bf16.msra.mxu0 0
      %1837 = vmatprep.subr.bf16.mxu0 0
      %1838 = vmatpush1.bf16.msra.mxu0 0
      %1839 = vmatprep.subr.bf16.mxu0 0
      %1840 = vmatpush1.bf16.msra.mxu0 0
      %1841 = vmatprep.subr.bf16.mxu0 0
      %1842 = vmatpush1.bf16.msra.mxu0 0
      %1843 = vmatprep.subr.bf16.mxu0 0
      %1844 = vmatpush1.bf16.msra.mxu0 0
      %1845 = vmatprep.mubr.bf16.mxu0 0
      %1846 = vmatmul.mubr.bf16.gmra.mrb[0].mxu0 %v1811
      %v1847 = vpop.f32.mrb[0].mxu0
      %v1848 = vadd.f32 %v1808, %v1847
      %v1849 = vpop.f32.mrb[0].mxu0
      %v1850 = vpop.f32.mrb[0].mxu0
      %v1851 = vadd.f32 %v1809, %v1850
      %v1852 = vpop.f32.mrb[0].mxu0
      %1853 = vdwg.mxu0
      %v1854 = vld [vmem:[%s3] sm:$0xff]
      %v1855 = vld [vmem:[%s3 + $0x8] sm:$0xff]
      %1857 = vset.pattern.permute.xlu0 0
      %1858 = vperm.xlu0 %1857, %v1854
      %v1859 = vpop.permute.xlu0 %1858
      %1862 = vset.pattern.permute.xlu0 0
      %1863 = vperm.xlu0 %1862, %v1855
      %v1864 = vpop.permute.xlu0 %1863
      %v1866 = vmul.f32 %v1848, %v1859
      %v1867 = vmul.f32 %v1851, %v1864
      %v1868 = vld [vmem:[%s8] sm:$0x1]
      %v1870 = vlaneseq
      %v1871 = vshrl.u32 %v1870, 7
      %v1872 = vsub.s32 0, %v1871
      %v1873 = vrot.slane %v1868, %v1872
      %v1875 = vadd.f32 %v1866, %v1873
      %v1876 = vadd.f32 %v1867, %v1873
      %v1877 = vmax.f32 %v1875, 0.0
      %v1878 = vmax.f32 %v1876, 0.0
      %1879 = vst.msk [vmem:[#allocation4] sm:$0xff] %vm1796, %v1877
      %1880 = vst.msk [vmem:[#allocation4 + $0x8] sm:$0xff] %vm1796, %v1878
    $region45: #{tpu_custom_call.1} parent=1 // pred_fallthru
      _
    // Predicated region
    $region46: #{tpu_custom_call.1} parent=1 // pred_check
      _
    $region47: #{tpu_custom_call.1} parent=1 // pred_check_branch
      %1882 = sbr.rel (0) target = $region49
    $region48: #{tpu_custom_call.1} parent=1 // pred_region
      %s1884 = ssub.s32 256, 256
      %1885 = vsyncadd [#allocation5], %s1884
      %s1886 = sshll.u32 [#allocation4], 4
      %s1887 = int_to_ptr.vmem [resolvable:$true] %s1886
      %1892 = dma.vmem_to_hbm [thread:$0]  %s1887, 256, %s9, [#allocation5], 128, 128, 8
    $region49: #{tpu_custom_call.1} parent=1 // pred_fallthru
      _
    // Predicated region
    $region50: #{tpu_custom_call.1} parent=1 // pred_check
      _
    $region51: #{tpu_custom_call.1} parent=1 // pred_check_branch
      %1894 = sbr.rel (0) target = $region53
    $region52: #{tpu_custom_call.1} parent=1 // pred_region
      %1895 = dma.done [#allocation5], 256
    $region53: #{tpu_custom_call.1} parent=1 // pred_fallthru
      _
    %1896 = vsyncpa [#allocation5], 1

</llo_original>
